<compile_context>
chip_gen: v6e
topology: v6e:2x2x1
jax: 0.10.0
libtpu: 0.0.40
codegen_flags: <defaults>
</compile_context>

<pallas_src>
import functools

import jax
import jax.numpy as jnp
import numpy as np
from jax.experimental import pallas as pl
from jax.experimental.pallas import tpu as pltpu

_LANE = 128


def _round_up(n, m=_LANE):
    return ((n + m - 1) // m) * m


def _inverted_residual_kernel(xs_ref, xt_ref, xb_ref, w1_ref, b1_ref,
                              wdw_ref, b2_ref, w3_ref, b3_ref, o_ref,
                              h_ref, *, use_shortcut):
    # xs_ref: (1, TH, W, CP)  bf16  current row strip of the input image
    # xt_ref: (1, 1, W, CP)   bf16  1-row halo above the strip (clamped)
    # xb_ref: (1, 1, W, CP)   bf16  1-row halo below the strip (clamped)
    # w1_ref: (CP, HP)        bf16  expand 1x1 weights, BN folded
    # wdw_ref: (9, 1, HP)     f32   depthwise 3x3 taps, row-major, BN folded
    # w3_ref: (HP, OP)        bf16  project 1x1 weights, BN folded
    # h_ref:  (TH+2, W, HP)   f32   VMEM scratch: expanded strip + halo rows
    _, TH, W, CP = xs_ref.shape
    HP = w1_ref.shape[1]
    OP = w3_ref.shape[1]
    t = pl.program_id(1)
    n_t = pl.num_programs(1)

    # ---- expand: 1x1 conv (channel matmul) + folded BN + ReLU6 -------------
    # Computed for the strip plus its 1-row halo in one MXU matmul (bf16 in,
    # f32 accumulate).
    x_ext = jnp.concatenate([xt_ref[0], xs_ref[0], xb_ref[0]], axis=0)
    h2d = jax.lax.dot_general(
        x_ext.reshape((TH + 2) * W, CP), w1_ref[...],
        (((1,), (0,)), ((), ())), preferred_element_type=jnp.float32)
    h3 = jnp.clip(h2d + b1_ref[...], 0.0, 6.0).reshape(TH + 2, W, HP)

    # Halo rows that fall outside the image must be the depthwise zero-pad.
    top_keep = jnp.where(t == 0, 0.0, 1.0)
    bot_keep = jnp.where(t == n_t - 1, 0.0, 1.0)
    h_ref[0:1] = h3[0:1] * top_keep
    h_ref[1:TH + 1] = h3[1:TH + 1]
    h_ref[TH + 1:TH + 2] = h3[TH + 1:TH + 2] * bot_keep

    # ---- depthwise 3x3 conv, stride 1, padding 1 + folded BN + ReLU6 -------
    # H offsets: aligned row slices of h_ref (outer dim, cheap).
    # W offsets: XLU sublane rolls + edge masks (no padded copy, no unaligned
    # sublane slices).  MAC kept in f32 (v5e-safe).
    # Edge masks vary only with W -> build them at (1, W, HP) and broadcast.
    col = jax.lax.broadcasted_iota(jnp.int32, (1, W, HP), 1)
    not_first_col = col > 0
    not_last_col = col < W - 1

    acc = jnp.zeros((TH, W, HP), jnp.float32)
    for di in range(3):
        rows = h_ref[di:di + TH]                         # (TH, W, HP) f32
        acc = acc + rows * wdw_ref[3 * di + 1]
        left = jnp.where(not_first_col, pltpu.roll(rows, 1, axis=1), 0.0)
        acc = acc + left * wdw_ref[3 * di + 0]
        right = jnp.where(not_last_col, pltpu.roll(rows, W - 1, axis=1), 0.0)
        acc = acc + right * wdw_ref[3 * di + 2]
    acc = jnp.clip(acc + b2_ref[...], 0.0, 6.0)

    # ---- project: 1x1 conv + folded BN (linear, no activation) -------------
    out = jax.lax.dot_general(
        acc.reshape(TH * W, HP).astype(jnp.bfloat16), w3_ref[...],
        (((1,), (0,)), ((), ())), preferred_element_type=jnp.float32)
    out = out + b3_ref[...]

    if use_shortcut:
        # Residual add in f32; single cast at the final store.
        out = out + xs_ref[0].reshape(TH * W, CP).astype(jnp.float32)

    o_ref[...] = out.reshape(1, TH, W, OP).astype(o_ref.dtype)


@functools.partial(jax.jit, static_argnames=("use_shortcut", "row_tile"))
def inverted_residual(x_nchw, w1e, b1, wdwe, b2, w3e, b3, *,
                      use_shortcut, row_tile=8):
    """x_nchw: (N, Cin, H, W) float32. Returns (N, Cout, H, W) float32."""
    N, Cin, H, W = x_nchw.shape
    Hid = w1e.shape[1]
    Cout = w3e.shape[1]
    CP, HP, OP = _round_up(Cin), _round_up(Hid), _round_up(Cout)
    if use_shortcut:
        assert Cin == Cout  # implied by the module definition

    TH = row_tile if (H % row_tile == 0) else H
    nT = H // TH

    # NCHW -> NHWC, bf16 HBM I/O, channels zero-padded to the 128-lane granule
    # (layout plumbing only; padded lanes stay zero end-to-end).
    x = jnp.transpose(x_nchw, (0, 2, 3, 1)).astype(jnp.bfloat16)
    x = jnp.pad(x, ((0, 0), (0, 0), (0, 0), (0, CP - Cin)))

    w1p = jnp.pad(w1e, ((0, CP - Cin), (0, HP - Hid))).astype(jnp.bfloat16)
    b1p = jnp.pad(b1, ((0, 0), (0, HP - Hid))).astype(jnp.float32)
    wdwp = jnp.pad(wdwe, ((0, 0), (0, 0), (0, HP - Hid))).astype(jnp.float32)
    b2p = jnp.pad(b2, ((0, 0), (0, HP - Hid))).astype(jnp.float32)
    w3p = jnp.pad(w3e, ((0, HP - Hid), (0, OP - Cout))).astype(jnp.bfloat16)
    b3p = jnp.pad(b3, ((0, 0), (0, OP - Cout))).astype(jnp.float32)

    kernel = functools.partial(_inverted_residual_kernel,
                               use_shortcut=use_shortcut)

    def fixed(shape):
        rank = len(shape)
        return pl.BlockSpec(shape, lambda n, t: (0,) * rank)

    out = pl.pallas_call(
        kernel,
        out_shape=jax.ShapeDtypeStruct((N, H, W, OP), jnp.bfloat16),
        grid_spec=pltpu.PrefetchScalarGridSpec(
            num_scalar_prefetch=0,
            grid=(N, nT),
            in_specs=[
                # main strip
                pl.BlockSpec((1, TH, W, CP), lambda n, t: (n, t, 0, 0)),
                # 1-row halo above (clamped; zeroed in-kernel when t == 0)
                pl.BlockSpec((1, 1, W, CP),
                             lambda n, t: (n, jnp.maximum(t * TH - 1, 0), 0, 0)),
                # 1-row halo below (clamped; zeroed in-kernel when t == last)
                pl.BlockSpec((1, 1, W, CP),
                             lambda n, t: (n, jnp.minimum((t + 1) * TH, H - 1), 0, 0)),
                fixed((CP, HP)),      # expand weights
                fixed((1, HP)),       # expand bias (folded BN)
                fixed((9, 1, HP)),    # depthwise taps
                fixed((1, HP)),       # depthwise bias
                fixed((HP, OP)),      # project weights
                fixed((1, OP)),       # project bias
            ],
            out_specs=pl.BlockSpec((1, TH, W, OP), lambda n, t: (n, t, 0, 0)),
            scratch_shapes=[pltpu.VMEM((TH + 2, W, HP), jnp.float32)],
        ),
        compiler_params=pltpu.CompilerParams(
            dimension_semantics=("parallel", "parallel"),
            vmem_limit_bytes=64 * 1024 * 1024),
    )(x, x, x, w1p, b1p, wdwp, b2p, w3p, b3p)

    out = out[..., :Cout].astype(jnp.float32)
    return jnp.transpose(out, (0, 3, 1, 2))  # back to NCHW


def reference_inverted_residual(x_nchw, w1e, b1, wdwe, b2, w3e, b3, *, use_shortcut):
    """Pure-JAX f32 reference using the same folded parameters."""
    x = jnp.transpose(x_nchw, (0, 2, 3, 1))
    h = jnp.einsum('nhwc,cd->nhwd', x, w1e) + b1.reshape(1, 1, 1, -1)
    h = jnp.clip(h, 0.0, 6.0)
    hid = h.shape[-1]
    wdw_hwio = wdwe.reshape(3, 3, 1, hid)
    d = jax.lax.conv_general_dilated(
        h, wdw_hwio, window_strides=(1, 1), padding='SAME',
        dimension_numbers=('NHWC', 'HWIO', 'NHWC'),
        feature_group_count=hid)
    d = jnp.clip(d + b2.reshape(1, 1, 1, -1), 0.0, 6.0)
    o = jnp.einsum('nhwd,de->nhwe', d, w3e) + b3.reshape(1, 1, 1, -1)
    if use_shortcut:
        o = o + x
    return jnp.transpose(o, (0, 3, 1, 2))


if __name__ == "__main__":
    # Module configuration (small demo shapes).
    N, in_ch, H, W = 2, 4, 16, 16
    out_ch, expand_ratio, stride = 4, 2, 1
    hid = in_ch * expand_ratio
    use_shortcut = (stride == 1 and in_ch == out_ch)

    key = jax.random.PRNGKey(0)
    kx, k1, k2, k3 = jax.random.split(key, 4)

    # Deterministic parameter init (PyTorch weight shapes, then folded).
    w1 = jax.random.normal(k1, (hid, in_ch), jnp.float32) * 0.1    # expand (hid,in,1,1)
    wdw = jax.random.normal(k2, (hid, 3, 3), jnp.float32) * 0.1    # depthwise (hid,1,3,3)
    w3 = jax.random.normal(k3, (out_ch, hid), jnp.float32) * 0.1   # project (out,hid,1,1)

    # BatchNorm (inference-mode fold): gamma=1, beta=0, mean=0, var=1, eps=1e-5.
    eps = 1e-5
    bn_scale = jnp.float32(1.0 / np.sqrt(1.0 + eps))

    def bf16_round(a):
        # Round once through bf16 so the kernel (bf16 I/O + bf16 MXU inputs)
        # and the f32 reference consume numerically identical values.
        return a.astype(jnp.bfloat16).astype(jnp.float32)

    w1e = bf16_round(jnp.asarray(w1.T * bn_scale, jnp.float32))        # (in_ch, hid)
    b1 = jnp.zeros((1, hid), jnp.float32)
    wdwe = jnp.asarray((wdw * bn_scale).transpose(1, 2, 0).reshape(9, 1, hid),
                       jnp.float32)                                    # (9,1,hid), stays f32
    b2 = jnp.zeros((1, hid), jnp.float32)
    w3e = bf16_round(jnp.asarray(w3.T * bn_scale, jnp.float32))        # (hid, out_ch)
    b3 = jnp.zeros((1, out_ch), jnp.float32)

    x = bf16_round(jax.random.normal(kx, (N, in_ch, H, W), jnp.float32))

    out = inverted_residual(x, w1e, b1, wdwe, b2, w3e, b3,
                            use_shortcut=use_shortcut)
    out = jax.block_until_ready(out)

    ref = reference_inverted_residual(x, w1e, b1, wdwe, b2, w3e, b3,
                                      use_shortcut=use_shortcut)
    ref = jax.block_until_ready(ref)

    # bf16 I/O + bf16 MXU inputs -> compare at bf16-appropriate tolerance.
    np.testing.assert_allclose(np.asarray(out), np.asarray(ref),
                               rtol=3e-2, atol=3e-2)
    print("KERNEL_OK")
</pallas_src>

<mosaic_0001>
module attributes {stable_mosaic.version = 11 : i64} {
  func.func @_inverted_residual_kernel(%arg0: i32, %arg1: i32, %arg2: memref<1x8x16x128xbf16, #tpu.memory_space<vmem>>, %arg3: memref<1x1x16x128xbf16, #tpu.memory_space<vmem>>, %arg4: memref<1x1x16x128xbf16, #tpu.memory_space<vmem>>, %arg5: memref<128x128xbf16, #tpu.memory_space<vmem>>, %arg6: memref<1x128xf32, #tpu.memory_space<vmem>>, %arg7: memref<9x1x128xf32, #tpu.memory_space<vmem>>, %arg8: memref<1x128xf32, #tpu.memory_space<vmem>>, %arg9: memref<128x128xbf16, #tpu.memory_space<vmem>>, %arg10: memref<1x128xf32, #tpu.memory_space<vmem>>, %arg11: memref<1x8x16x128xbf16, #tpu.memory_space<vmem>>, %arg12: memref<10x16x128xf32, #tpu.memory_space<vmem>>) attributes {dimension_semantics = [#tpu.dimension_semantics<parallel>, #tpu.dimension_semantics<parallel>], iteration_bounds = array<i64: 2, 2>, scalar_prefetch = 0 : i64, scratch_operands = 1 : i64, tpu.core_type = #tpu.core_type<tc>, window_params = [{transform_indices = @transform_0, window_bounds = array<i64: 1, 8, 16, 128>}, {transform_indices = @transform_1, window_bounds = array<i64: 1, 1, 16, 128>}, {transform_indices = @transform_2, window_bounds = array<i64: 1, 1, 16, 128>}, {pipeline_mode = #tpu.pipeline_mode<synchronous>, transform_indices = @transform_3, window_bounds = array<i64: 128, 128>}, {pipeline_mode = #tpu.pipeline_mode<synchronous>, transform_indices = @transform_4, window_bounds = array<i64: 1, 128>}, {pipeline_mode = #tpu.pipeline_mode<synchronous>, transform_indices = @transform_5, window_bounds = array<i64: 9, 1, 128>}, {pipeline_mode = #tpu.pipeline_mode<synchronous>, transform_indices = @transform_6, window_bounds = array<i64: 1, 128>}, {pipeline_mode = #tpu.pipeline_mode<synchronous>, transform_indices = @transform_7, window_bounds = array<i64: 128, 128>}, {pipeline_mode = #tpu.pipeline_mode<synchronous>, transform_indices = @transform_8, window_bounds = array<i64: 1, 128>}, {transform_indices = @transform_9, window_bounds = array<i64: 1, 8, 16, 128>}]} {
    %c0 = arith.constant 0 : index
    %c0_0 = arith.constant 0 : index
    %c0_1 = arith.constant 0 : index
    %c0_2 = arith.constant 0 : index
    %0 = vector.load %arg3[%c0, %c0_0, %c0_1, %c0_2] : memref<1x1x16x128xbf16, #tpu.memory_space<vmem>>, vector<1x1x16x128xbf16>
    %1 = vector.shape_cast %0 : vector<1x1x16x128xbf16> to vector<1x16x128xbf16>
    %c0_3 = arith.constant 0 : index
    %c0_4 = arith.constant 0 : index
    %c0_5 = arith.constant 0 : index
    %c0_6 = arith.constant 0 : index
    %2 = vector.load %arg2[%c0_3, %c0_4, %c0_5, %c0_6] : memref<1x8x16x128xbf16, #tpu.memory_space<vmem>>, vector<1x8x16x128xbf16>
    %3 = vector.shape_cast %2 : vector<1x8x16x128xbf16> to vector<8x16x128xbf16>
    %c0_7 = arith.constant 0 : index
    %c0_8 = arith.constant 0 : index
    %c0_9 = arith.constant 0 : index
    %c0_10 = arith.constant 0 : index
    %4 = vector.load %arg4[%c0_7, %c0_8, %c0_9, %c0_10] : memref<1x1x16x128xbf16, #tpu.memory_space<vmem>>, vector<1x1x16x128xbf16>
    %5 = vector.shape_cast %4 : vector<1x1x16x128xbf16> to vector<1x16x128xbf16>
    %6 = tpu.concatenate %1, %3, %5 in 0 : vector<1x16x128xbf16>, vector<8x16x128xbf16>, vector<1x16x128xbf16> -> vector<10x16x128xbf16>
    %7 = vector.shape_cast %6 : vector<10x16x128xbf16> to vector<160x128xbf16>
    %c0_11 = arith.constant 0 : index
    %c0_12 = arith.constant 0 : index
    %8 = vector.load %arg5[%c0_11, %c0_12] : memref<128x128xbf16, #tpu.memory_space<vmem>>, vector<128x128xbf16>
    %cst = arith.constant dense<0.000000e+00> : vector<160x128xf32>
    %9 = tpu.matmul %7, %8, %cst {dimension_numbers = #tpu.dot_dimension_numbers<[1], [0], [0], [1], [0, 0, 1, 1], [], []>} : vector<160x128xbf16>, vector<128x128xbf16>, vector<160x128xf32> -> vector<160x128xf32>
    %c0_13 = arith.constant 0 : index
    %c0_14 = arith.constant 0 : index
    %10 = vector.load %arg6[%c0_13, %c0_14] : memref<1x128xf32, #tpu.memory_space<vmem>>, vector<1x128xf32>
    %11 = vector.broadcast %10 : vector<1x128xf32> to vector<160x128xf32>
    %12 = arith.addf %9, %11 : vector<160x128xf32>
    %cst_15 = arith.constant 0.000000e+00 : f32
    %cst_16 = arith.constant 6.000000e+00 : f32
    %13 = vector.broadcast %cst_15 : f32 to vector<160x128xf32>
    %14 = arith.maximumf %13, %12 : vector<160x128xf32>
    %15 = vector.broadcast %cst_16 : f32 to vector<160x128xf32>
    %16 = arith.minimumf %15, %14 : vector<160x128xf32>
    %17 = vector.shape_cast %16 : vector<160x128xf32> to vector<10x16x128xf32>
    %c0_i32 = arith.constant 0 : i32
    %18 = arith.cmpi eq, %arg1, %c0_i32 : i32
    %cst_17 = arith.constant 0.000000e+00 : f32
    %cst_18 = arith.constant 1.000000e+00 : f32
    %19 = arith.select %18, %cst_17, %cst_18 : f32
    %c1_i32 = arith.constant 1 : i32
    %20 = arith.cmpi eq, %arg1, %c1_i32 : i32
    %cst_19 = arith.constant 0.000000e+00 : f32
    %cst_20 = arith.constant 1.000000e+00 : f32
    %21 = arith.select %20, %cst_19, %cst_20 : f32
    %22 = vector.extract_strided_slice %17 {offsets = [0, 0, 0], sizes = [1, 16, 128], strides = [1, 1, 1]} : vector<10x16x128xf32> to vector<1x16x128xf32>
    %23 = vector.broadcast %19 : f32 to vector<1x16x128xf32>
    %24 = arith.mulf %22, %23 : vector<1x16x128xf32>
    %c0_21 = arith.constant 0 : index
    %c0_22 = arith.constant 0 : index
    %c0_23 = arith.constant 0 : index
    %25 = vector.load %arg12[%c0_21, %c0_22, %c0_23] : memref<10x16x128xf32, #tpu.memory_space<vmem>>, vector<1x16x128xf32>
    tpu.vector_store %arg12[%c0_21, %c0_22, %c0_23], %24 {strides = array<i32>} : memref<10x16x128xf32, #tpu.memory_space<vmem>>, vector<1x16x128xf32>,
    %26 = vector.extract_strided_slice %17 {offsets = [1, 0, 0], sizes = [8, 16, 128], strides = [1, 1, 1]} : vector<10x16x128xf32> to vector<8x16x128xf32>
    %c1 = arith.constant 1 : index
    %c0_24 = arith.constant 0 : index
    %c0_25 = arith.constant 0 : index
    %27 = vector.load %arg12[%c1, %c0_24, %c0_25] : memref<10x16x128xf32, #tpu.memory_space<vmem>>, vector<8x16x128xf32>
    tpu.vector_store %arg12[%c1, %c0_24, %c0_25], %26 {strides = array<i32>} : memref<10x16x128xf32, #tpu.memory_space<vmem>>, vector<8x16x128xf32>,
    %28 = vector.extract_strided_slice %17 {offsets = [9, 0, 0], sizes = [1, 16, 128], strides = [1, 1, 1]} : vector<10x16x128xf32> to vector<1x16x128xf32>
    %29 = vector.broadcast %21 : f32 to vector<1x16x128xf32>
    %30 = arith.mulf %28, %29 : vector<1x16x128xf32>
    %c9 = arith.constant 9 : index
    %c0_26 = arith.constant 0 : index
    %c0_27 = arith.constant 0 : index
    %31 = vector.load %arg12[%c9, %c0_26, %c0_27] : memref<10x16x128xf32, #tpu.memory_space<vmem>>, vector<1x16x128xf32>
    tpu.vector_store %arg12[%c9, %c0_26, %c0_27], %30 {strides = array<i32>} : memref<10x16x128xf32, #tpu.memory_space<vmem>>, vector<1x16x128xf32>,
    %32 = tpu.iota {dimensions = array<i32: 1>} : vector<1x16x128xi32>
    %c0_i32_28 = arith.constant 0 : i32
    %33 = vector.broadcast %c0_i32_28 : i32 to vector<1x16x128xi32>
    %34 = arith.cmpi sgt, %32, %33 : vector<1x16x128xi32>
    %c15_i32 = arith.constant 15 : i32
    %35 = vector.broadcast %c15_i32 : i32 to vector<1x16x128xi32>
    %36 = arith.cmpi slt, %32, %35 : vector<1x16x128xi32>
    %cst_29 = arith.constant 0.000000e+00 : f32
    %37 = vector.broadcast %cst_29 : f32 to vector<8x16x128xf32>
    %c0_30 = arith.constant 0 : index
    %c0_31 = arith.constant 0 : index
    %c0_32 = arith.constant 0 : index
    %38 = vector.load %arg12[%c0_30, %c0_31, %c0_32] : memref<10x16x128xf32, #tpu.memory_space<vmem>>, vector<8x16x128xf32>
    %c1_33 = arith.constant 1 : index
    %c0_34 = arith.constant 0 : index
    %c0_35 = arith.constant 0 : index
    %39 = vector.load %arg7[%c1_33, %c0_34, %c0_35] : memref<9x1x128xf32, #tpu.memory_space<vmem>>, vector<1x1x128xf32>
    %40 = vector.shape_cast %39 : vector<1x1x128xf32> to vector<1x128xf32>
    %41 = vector.shape_cast %40 : vector<1x128xf32> to vector<1x1x128xf32>
    %42 = vector.broadcast %41 : vector<1x1x128xf32> to vector<8x16x128xf32>
    %43 = arith.mulf %38, %42 : vector<8x16x128xf32>
    %44 = arith.addf %37, %43 : vector<8x16x128xf32>
    %c1_i32_36 = arith.constant 1 : i32
    %45 = tpu.dynamic_rotate %38 by %c1_i32_36 dim 1 : vector<8x16x128xf32>, i32 -> vector<8x16x128xf32>
    %cst_37 = arith.constant 0.000000e+00 : f32
    %46 = vector.shape_cast %34 : vector<1x16x128xi1> to vector<1x16x128xi1>
    %47 = vector.broadcast %46 : vector<1x16x128xi1> to vector<8x16x128xi1>
    %48 = vector.broadcast %cst_37 : f32 to vector<8x16x128xf32>
    %49 = arith.select %47, %45, %48 : vector<8x16x128xi1>, vector<8x16x128xf32>
    %c0_38 = arith.constant 0 : index
    %c0_39 = arith.constant 0 : index
    %c0_40 = arith.constant 0 : index
    %50 = vector.load %arg7[%c0_38, %c0_39, %c0_40] : memref<9x1x128xf32, #tpu.memory_space<vmem>>, vector<1x1x128xf32>
    %51 = vector.shape_cast %50 : vector<1x1x128xf32> to vector<1x128xf32>
    %52 = vector.shape_cast %51 : vector<1x128xf32> to vector<1x1x128xf32>
    %53 = vector.broadcast %52 : vector<1x1x128xf32> to vector<8x16x128xf32>
    %54 = arith.mulf %49, %53 : vector<8x16x128xf32>
    %55 = arith.addf %44, %54 : vector<8x16x128xf32>
    %c15_i32_41 = arith.constant 15 : i32
    %56 = tpu.dynamic_rotate %38 by %c15_i32_41 dim 1 : vector<8x16x128xf32>, i32 -> vector<8x16x128xf32>
    %cst_42 = arith.constant 0.000000e+00 : f32
    %57 = vector.shape_cast %36 : vector<1x16x128xi1> to vector<1x16x128xi1>
    %58 = vector.broadcast %57 : vector<1x16x128xi1> to vector<8x16x128xi1>
    %59 = vector.broadcast %cst_42 : f32 to vector<8x16x128xf32>
    %60 = arith.select %58, %56, %59 : vector<8x16x128xi1>, vector<8x16x128xf32>
    %c2 = arith.constant 2 : index
    %c0_43 = arith.constant 0 : index
    %c0_44 = arith.constant 0 : index
    %61 = vector.load %arg7[%c2, %c0_43, %c0_44] : memref<9x1x128xf32, #tpu.memory_space<vmem>>, vector<1x1x128xf32>
    %62 = vector.shape_cast %61 : vector<1x1x128xf32> to vector<1x128xf32>
    %63 = vector.shape_cast %62 : vector<1x128xf32> to vector<1x1x128xf32>
    %64 = vector.broadcast %63 : vector<1x1x128xf32> to vector<8x16x128xf32>
    %65 = arith.mulf %60, %64 : vector<8x16x128xf32>
    %66 = arith.addf %55, %65 : vector<8x16x128xf32>
    %c1_45 = arith.constant 1 : index
    %c0_46 = arith.constant 0 : index
    %c0_47 = arith.constant 0 : index
    %67 = vector.load %arg12[%c1_45, %c0_46, %c0_47] : memref<10x16x128xf32, #tpu.memory_space<vmem>>, vector<8x16x128xf32>
    %c4 = arith.constant 4 : index
    %c0_48 = arith.constant 0 : index
    %c0_49 = arith.constant 0 : index
    %68 = vector.load %arg7[%c4, %c0_48, %c0_49] : memref<9x1x128xf32, #tpu.memory_space<vmem>>, vector<1x1x128xf32>
    %69 = vector.shape_cast %68 : vector<1x1x128xf32> to vector<1x128xf32>
    %70 = vector.shape_cast %69 : vector<1x128xf32> to vector<1x1x128xf32>
    %71 = vector.broadcast %70 : vector<1x1x128xf32> to vector<8x16x128xf32>
    %72 = arith.mulf %67, %71 : vector<8x16x128xf32>
    %73 = arith.addf %66, %72 : vector<8x16x128xf32>
    %c1_i32_50 = arith.constant 1 : i32
    %74 = tpu.dynamic_rotate %67 by %c1_i32_50 dim 1 : vector<8x16x128xf32>, i32 -> vector<8x16x128xf32>
    %cst_51 = arith.constant 0.000000e+00 : f32
    %75 = vector.shape_cast %34 : vector<1x16x128xi1> to vector<1x16x128xi1>
    %76 = vector.broadcast %75 : vector<1x16x128xi1> to vector<8x16x128xi1>
    %77 = vector.broadcast %cst_51 : f32 to vector<8x16x128xf32>
    %78 = arith.select %76, %74, %77 : vector<8x16x128xi1>, vector<8x16x128xf32>
    %c3 = arith.constant 3 : index
    %c0_52 = arith.constant 0 : index
    %c0_53 = arith.constant 0 : index
    %79 = vector.load %arg7[%c3, %c0_52, %c0_53] : memref<9x1x128xf32, #tpu.memory_space<vmem>>, vector<1x1x128xf32>
    %80 = vector.shape_cast %79 : vector<1x1x128xf32> to vector<1x128xf32>
    %81 = vector.shape_cast %80 : vector<1x128xf32> to vector<1x1x128xf32>
    %82 = vector.broadcast %81 : vector<1x1x128xf32> to vector<8x16x128xf32>
    %83 = arith.mulf %78, %82 : vector<8x16x128xf32>
    %84 = arith.addf %73, %83 : vector<8x16x128xf32>
    %c15_i32_54 = arith.constant 15 : i32
    %85 = tpu.dynamic_rotate %67 by %c15_i32_54 dim 1 : vector<8x16x128xf32>, i32 -> vector<8x16x128xf32>
    %cst_55 = arith.constant 0.000000e+00 : f32
    %86 = vector.shape_cast %36 : vector<1x16x128xi1> to vector<1x16x128xi1>
    %87 = vector.broadcast %86 : vector<1x16x128xi1> to vector<8x16x128xi1>
    %88 = vector.broadcast %cst_55 : f32 to vector<8x16x128xf32>
    %89 = arith.select %87, %85, %88 : vector<8x16x128xi1>, vector<8x16x128xf32>
    %c5 = arith.constant 5 : index
    %c0_56 = arith.constant 0 : index
    %c0_57 = arith.constant 0 : index
    %90 = vector.load %arg7[%c5, %c0_56, %c0_57] : memref<9x1x128xf32, #tpu.memory_space<vmem>>, vector<1x1x128xf32>
    %91 = vector.shape_cast %90 : vector<1x1x128xf32> to vector<1x128xf32>
    %92 = vector.shape_cast %91 : vector<1x128xf32> to vector<1x1x128xf32>
    %93 = vector.broadcast %92 : vector<1x1x128xf32> to vector<8x16x128xf32>
    %94 = arith.mulf %89, %93 : vector<8x16x128xf32>
    %95 = arith.addf %84, %94 : vector<8x16x128xf32>
    %c2_58 = arith.constant 2 : index
    %c0_59 = arith.constant 0 : index
    %c0_60 = arith.constant 0 : index
    %96 = vector.load %arg12[%c2_58, %c0_59, %c0_60] : memref<10x16x128xf32, #tpu.memory_space<vmem>>, vector<8x16x128xf32>
    %c7 = arith.constant 7 : index
    %c0_61 = arith.constant 0 : index
    %c0_62 = arith.constant 0 : index
    %97 = vector.load %arg7[%c7, %c0_61, %c0_62] : memref<9x1x128xf32, #tpu.memory_space<vmem>>, vector<1x1x128xf32>
    %98 = vector.shape_cast %97 : vector<1x1x128xf32> to vector<1x128xf32>
    %99 = vector.shape_cast %98 : vector<1x128xf32> to vector<1x1x128xf32>
    %100 = vector.broadcast %99 : vector<1x1x128xf32> to vector<8x16x128xf32>
    %101 = arith.mulf %96, %100 : vector<8x16x128xf32>
    %102 = arith.addf %95, %101 : vector<8x16x128xf32>
    %c1_i32_63 = arith.constant 1 : i32
    %103 = tpu.dynamic_rotate %96 by %c1_i32_63 dim 1 : vector<8x16x128xf32>, i32 -> vector<8x16x128xf32>
    %cst_64 = arith.constant 0.000000e+00 : f32
    %104 = vector.shape_cast %34 : vector<1x16x128xi1> to vector<1x16x128xi1>
    %105 = vector.broadcast %104 : vector<1x16x128xi1> to vector<8x16x128xi1>
    %106 = vector.broadcast %cst_64 : f32 to vector<8x16x128xf32>
    %107 = arith.select %105, %103, %106 : vector<8x16x128xi1>, vector<8x16x128xf32>
    %c6 = arith.constant 6 : index
    %c0_65 = arith.constant 0 : index
    %c0_66 = arith.constant 0 : index
    %108 = vector.load %arg7[%c6, %c0_65, %c0_66] : memref<9x1x128xf32, #tpu.memory_space<vmem>>, vector<1x1x128xf32>
    %109 = vector.shape_cast %108 : vector<1x1x128xf32> to vector<1x128xf32>
    %110 = vector.shape_cast %109 : vector<1x128xf32> to vector<1x1x128xf32>
    %111 = vector.broadcast %110 : vector<1x1x128xf32> to vector<8x16x128xf32>
    %112 = arith.mulf %107, %111 : vector<8x16x128xf32>
    %113 = arith.addf %102, %112 : vector<8x16x128xf32>
    %c15_i32_67 = arith.constant 15 : i32
    %114 = tpu.dynamic_rotate %96 by %c15_i32_67 dim 1 : vector<8x16x128xf32>, i32 -> vector<8x16x128xf32>
    %cst_68 = arith.constant 0.000000e+00 : f32
    %115 = vector.shape_cast %36 : vector<1x16x128xi1> to vector<1x16x128xi1>
    %116 = vector.broadcast %115 : vector<1x16x128xi1> to vector<8x16x128xi1>
    %117 = vector.broadcast %cst_68 : f32 to vector<8x16x128xf32>
    %118 = arith.select %116, %114, %117 : vector<8x16x128xi1>, vector<8x16x128xf32>
    %c8 = arith.constant 8 : index
    %c0_69 = arith.constant 0 : index
    %c0_70 = arith.constant 0 : index
    %119 = vector.load %arg7[%c8, %c0_69, %c0_70] : memref<9x1x128xf32, #tpu.memory_space<vmem>>, vector<1x1x128xf32>
    %120 = vector.shape_cast %119 : vector<1x1x128xf32> to vector<1x128xf32>
    %121 = vector.shape_cast %120 : vector<1x128xf32> to vector<1x1x128xf32>
    %122 = vector.broadcast %121 : vector<1x1x128xf32> to vector<8x16x128xf32>
    %123 = arith.mulf %118, %122 : vector<8x16x128xf32>
    %124 = arith.addf %113, %123 : vector<8x16x128xf32>
    %c0_71 = arith.constant 0 : index
    %c0_72 = arith.constant 0 : index
    %125 = vector.load %arg8[%c0_71, %c0_72] : memref<1x128xf32, #tpu.memory_space<vmem>>, vector<1x128xf32>
    %126 = vector.shape_cast %125 : vector<1x128xf32> to vector<1x1x128xf32>
    %127 = vector.broadcast %126 : vector<1x1x128xf32> to vector<8x16x128xf32>
    %128 = arith.addf %124, %127 : vector<8x16x128xf32>
    %cst_73 = arith.constant 0.000000e+00 : f32
    %cst_74 = arith.constant 6.000000e+00 : f32
    %129 = vector.broadcast %cst_73 : f32 to vector<8x16x128xf32>
    %130 = arith.maximumf %129, %128 : vector<8x16x128xf32>
    %131 = vector.broadcast %cst_74 : f32 to vector<8x16x128xf32>
    %132 = arith.minimumf %131, %130 : vector<8x16x128xf32>
    %133 = vector.shape_cast %132 : vector<8x16x128xf32> to vector<128x128xf32>
    %134 = arith.truncf %133 : vector<128x128xf32> to vector<128x128xbf16>
    %c0_75 = arith.constant 0 : index
    %c0_76 = arith.constant 0 : index
    %135 = vector.load %arg9[%c0_75, %c0_76] : memref<128x128xbf16, #tpu.memory_space<vmem>>, vector<128x128xbf16>
    %cst_77 = arith.constant dense<0.000000e+00> : vector<128x128xf32>
    %136 = tpu.matmul %134, %135, %cst_77 {dimension_numbers = #tpu.dot_dimension_numbers<[1], [0], [0], [1], [0, 0, 1, 1], [], []>} : vector<128x128xbf16>, vector<128x128xbf16>, vector<128x128xf32> -> vector<128x128xf32>
    %c0_78 = arith.constant 0 : index
    %c0_79 = arith.constant 0 : index
    %137 = vector.load %arg10[%c0_78, %c0_79] : memref<1x128xf32, #tpu.memory_space<vmem>>, vector<1x128xf32>
    %138 = vector.broadcast %137 : vector<1x128xf32> to vector<128x128xf32>
    %139 = arith.addf %136, %138 : vector<128x128xf32>
    %c0_80 = arith.constant 0 : index
    %c0_81 = arith.constant 0 : index
    %c0_82 = arith.constant 0 : index
    %c0_83 = arith.constant 0 : index
    %140 = vector.load %arg2[%c0_80, %c0_81, %c0_82, %c0_83] : memref<1x8x16x128xbf16, #tpu.memory_space<vmem>>, vector<1x8x16x128xbf16>
    %141 = vector.shape_cast %140 : vector<1x8x16x128xbf16> to vector<8x16x128xbf16>
    %142 = vector.shape_cast %141 : vector<8x16x128xbf16> to vector<128x128xbf16>
    %143 = arith.extf %142 : vector<128x128xbf16> to vector<128x128xf32>
    %144 = arith.addf %139, %143 : vector<128x128xf32>
    %145 = vector.shape_cast %144 : vector<128x128xf32> to vector<1x8x16x128xf32>
    %146 = arith.truncf %145 : vector<1x8x16x128xf32> to vector<1x8x16x128xbf16>
    %c0_84 = arith.constant 0 : index
    %c0_85 = arith.constant 0 : index
    %c0_86 = arith.constant 0 : index
    %c0_87 = arith.constant 0 : index
    %147 = vector.load %arg11[%c0_84, %c0_85, %c0_86, %c0_87] : memref<1x8x16x128xbf16, #tpu.memory_space<vmem>>, vector<1x8x16x128xbf16>
    tpu.vector_store %arg11[%c0_84, %c0_85, %c0_86, %c0_87], %146 {strides = array<i32>} : memref<1x8x16x128xbf16, #tpu.memory_space<vmem>>, vector<1x8x16x128xbf16>,
    return
  }
  func.func @transform_0(%arg0: i32, %arg1: i32) -> (i32, i32, i32, i32) {
    %c0_i32 = arith.constant 0 : i32
    %c0_i32_0 = arith.constant 0 : i32
    %c0_i32_1 = arith.constant 0 : i32
    return %arg0, %arg1, %c0_i32, %c0_i32_0 : i32, i32, i32, i32
  }
  func.func @transform_1(%arg0: i32, %arg1: i32) -> (i32, i32, i32, i32) {
    %c8_i32 = arith.constant 8 : i32
    %0 = arith.muli %arg1, %c8_i32 : i32
    %c1_i32 = arith.constant 1 : i32
    %1 = arith.subi %0, %c1_i32 : i32
    %c0_i32 = arith.constant 0 : i32
    %2 = arith.maxsi %1, %c0_i32 : i32
    %c0_i32_0 = arith.constant 0 : i32
    %c0_i32_1 = arith.constant 0 : i32
    %c0_i32_2 = arith.constant 0 : i32
    return %arg0, %2, %c0_i32_0, %c0_i32_1 : i32, i32, i32, i32
  }
  func.func @transform_2(%arg0: i32, %arg1: i32) -> (i32, i32, i32, i32) {
    %c1_i32 = arith.constant 1 : i32
    %0 = arith.addi %arg1, %c1_i32 : i32
    %c8_i32 = arith.constant 8 : i32
    %1 = arith.muli %0, %c8_i32 : i32
    %c15_i32 = arith.constant 15 : i32
    %2 = arith.minsi %1, %c15_i32 : i32
    %c0_i32 = arith.constant 0 : i32
    %c0_i32_0 = arith.constant 0 : i32
    %c0_i32_1 = arith.constant 0 : i32
    return %arg0, %2, %c0_i32, %c0_i32_0 : i32, i32, i32, i32
  }
  func.func @transform_3(%arg0: i32, %arg1: i32) -> (i32, i32) {
    %c0_i32 = arith.constant 0 : i32
    %c0_i32_0 = arith.constant 0 : i32
    %c0_i32_1 = arith.constant 0 : i32
    return %c0_i32, %c0_i32_0 : i32, i32
  }
  func.func @transform_4(%arg0: i32, %arg1: i32) -> (i32, i32) {
    %c0_i32 = arith.constant 0 : i32
    %c0_i32_0 = arith.constant 0 : i32
    %c0_i32_1 = arith.constant 0 : i32
    return %c0_i32, %c0_i32_0 : i32, i32
  }
  func.func @transform_5(%arg0: i32, %arg1: i32) -> (i32, i32, i32) {
    %c0_i32 = arith.constant 0 : i32
    %c0_i32_0 = arith.constant 0 : i32
    %c0_i32_1 = arith.constant 0 : i32
    %c0_i32_2 = arith.constant 0 : i32
    return %c0_i32, %c0_i32_0, %c0_i32_1 : i32, i32, i32
  }
  func.func @transform_6(%arg0: i32, %arg1: i32) -> (i32, i32) {
    %c0_i32 = arith.constant 0 : i32
    %c0_i32_0 = arith.constant 0 : i32
    %c0_i32_1 = arith.constant 0 : i32
    return %c0_i32, %c0_i32_0 : i32, i32
  }
  func.func @transform_7(%arg0: i32, %arg1: i32) -> (i32, i32) {
    %c0_i32 = arith.constant 0 : i32
    %c0_i32_0 = arith.constant 0 : i32
    %c0_i32_1 = arith.constant 0 : i32
    return %c0_i32, %c0_i32_0 : i32, i32
  }
  func.func @transform_8(%arg0: i32, %arg1: i32) -> (i32, i32) {
    %c0_i32 = arith.constant 0 : i32
    %c0_i32_0 = arith.constant 0 : i32
    %c0_i32_1 = arith.constant 0 : i32
    return %c0_i32, %c0_i32_0 : i32, i32
  }
  func.func @transform_9(%arg0: i32, %arg1: i32) -> (i32, i32, i32, i32) {
    %c0_i32 = arith.constant 0 : i32
    %c0_i32_0 = arith.constant 0 : i32
    %c0_i32_1 = arith.constant 0 : i32
    return %arg0, %arg1, %c0_i32, %c0_i32_0 : i32, i32, i32, i32
  }
}

</mosaic_0001>

<llo_original>
// kernel: inverted_residual.1
$region0: #{inverted_residual.1}
  #allocation0 [shape = 'u32[]', space=smem, size = 0x4, offset = 0x4, fixed_abs, tag = 'smem constant byte address 0x4 - core index']
  #allocation1 [shape = 'u32[144,128]{1,0:T(1,128)}', space=vmem, size = 0x12000, scoped, tag = 'internal scratch']
  #allocation2 [shape = 'f32[10,16,128]{2,1,0:T(8,128)}', space=vmem, size = 0x14000, scoped, tag = 'scratch operand']
  %s0 = inlined_call_operand.vmem [shape: bf16[2,16,16,128], index: 0, kind: input, shape index: {}, may-alias: {0,1,2}]
  %s1 = inlined_call_operand.vmem [shape: bf16[2,16,16,128], index: 1, kind: input, shape index: {}, may-alias: {0,1,2}]
  %s2 = inlined_call_operand.vmem [shape: bf16[2,16,16,128], index: 2, kind: input, shape index: {}, may-alias: {0,1,2}]
  %s3 = inlined_call_operand.vmem [shape: bf16[128,128], index: 3, kind: input, shape index: {}]
  %s4 = inlined_call_operand.vmem [shape: f32[1,128], index: 4, kind: input, shape index: {}]
  %s5 = inlined_call_operand.vmem [shape: f32[9,1,128], index: 5, kind: input, shape index: {}]
  %s6 = inlined_call_operand.vmem [shape: f32[1,128], index: 6, kind: input, shape index: {}]
  %s7 = inlined_call_operand.vmem [shape: bf16[128,128], index: 7, kind: input, shape index: {}]
  %s8 = inlined_call_operand.vmem [shape: f32[1,128], index: 8, kind: input, shape index: {}]
  %s9 = inlined_call_operand.vmem [shape: bf16[2,16,16,128], index: 9, kind: output, shape index: {}]
  %s10 = sld [smem:[#allocation0]]
  $region69: #{inverted_residual.1} parent=0
    _
  %s12 = ssub.s32 1, %s10
  %s13 = scalar_select 0, %s12, %s10
  loop: start=0, step=1, limit=6
  $region2: #{inverted_residual.1} parent=0 // loop_pre_header
    _
  $region3: #{inverted_residual.1} parent=0 // loop_header
    %s15 = sphi 0, %s19
    %p16 = scmp.ge.s32.totalorder %s15, 6
    %s22 = sphi 0, %s34
    %s23 = sphi 0, %s30
    %s24 = sphi 0, %s22
    %s25 = sphi 0, %s23
    %s26 = sphi 0, %s24
    %s27 = sphi 0, %s25
    %s39 = sphi 0, %s41
    %s42 = sphi 0, %s39
    %s43 = sphi 0, %s42
    %s59 = sphi 0, %s43
    %s75 = sphi 0, %s77
    %s78 = sphi 0, %s75
    %s79 = sphi 0, %s78
    %s95 = sphi 0, %s79
    %s111 = sphi 0, %s113
    %s114 = sphi 0, %s111
    %s115 = sphi 0, %s114
    %s131 = sphi 0, %s115
    %s135 = sphi 0, %s135
    %s137 = sphi 0, %s135
    %s138 = sphi 0, %s137
    %s152 = sphi 0, %s138
    %s156 = sphi 0, %s156
    %s158 = sphi 0, %s156
    %s159 = sphi 0, %s158
    %s173 = sphi 0, %s159
    %s177 = sphi 0, %s177
    %s179 = sphi 0, %s177
    %s180 = sphi 0, %s179
    %s194 = sphi 0, %s180
    %s198 = sphi 0, %s198
    %s200 = sphi 0, %s198
    %s201 = sphi 0, %s200
    %s215 = sphi 0, %s201
    %s219 = sphi 0, %s219
    %s221 = sphi 0, %s219
    %s222 = sphi 0, %s221
    %s236 = sphi 0, %s222
    %s240 = sphi 0, %s240
    %s242 = sphi 0, %s240
    %s243 = sphi 0, %s242
    %s257 = sphi 0, %s243
    %s265 = sphi 0, %s267
    %s268 = sphi 0, %s265
    %s269 = sphi 0, %s268
    %s285 = sphi 0, %s269
  $region4: #{inverted_residual.1} parent=0 // loop_header_branch
    %18 = sbr.rel (%p16) target = $region8
  $region5: #{inverted_residual.1} parent=0 // loop_body
    %s20 = ssub.s32 %s15, 1
    %s21 = ssub.s32 %s15, 2
    %s28 = sadd.s32 1, %s23
    %p29 = scmp.ge.s32.totalorder %s28, 2
    %s30 = scalar_select %p29, 0, %s28
    %s31 = sadd.s32 1, %s22
    %s32 = scalar_select %p29, %s31, %s22
    %p33 = scmp.ge.s32.totalorder %s32, 2
    %s34 = scalar_select %p33, 0, %s32
    %s35 = ssub.s32 %s22, %s34
    %s36 = ssub.s32 %s23, %s30
    %s37 = sor.u32 %s35, %s36
    %p38 = scmp.eq.s32.totalorder %s37, 0
    %s40 = sadd.s32 %s39, 1
    %s41 = scalar_select %p38, %s39, %s40
    %p44 = pneg %p38
    %p45 = scmp.eq.s32.totalorder %s15, 3
    %p46 = por %p44, %p45
    %p47 = scmp.ne.s32.totalorder %s39, %s42
    %p48 = scmp.eq.s32.totalorder %s15, 0
    %p49 = por %p47, %p48
    %p50 = scmp.ne.s32.totalorder %s39, %s42
    %p51 = scmp.eq.s32.totalorder %s20, 3
    %p52 = por %p50, %p51
    %p53 = scmp.ne.s32.totalorder %s42, %s43
    %p54 = scmp.eq.s32.totalorder %s20, 0
    %p55 = por %p53, %p54
    %p56 = scmp.ne.s32.totalorder %s42, %s43
    %p57 = scmp.eq.s32.totalorder %s21, 3
    %p58 = por %p56, %p57
    %p60 = scmp.ne.s32.totalorder %s43, %s59
    %p61 = scmp.eq.s32.totalorder %s21, 0
    %p62 = por %p60, %p61
    %s63 = smul.u32 %s23, 8
    %s64 = ssub.s32 %s63, 1
    %p65 = scmp.gt.s32.totalorder %s64, 0
    %s66 = scalar_select %p65, %s64, 0
    %s67 = smul.u32 %s30, 8
    %s68 = ssub.s32 %s67, 1
    %p69 = scmp.gt.s32.totalorder %s68, 0
    %s70 = scalar_select %p69, %s68, 0
    %s71 = ssub.s32 %s22, %s34
    %s72 = ssub.s32 %s66, %s70
    %s73 = sor.u32 %s71, %s72
    %p74 = scmp.eq.s32.totalorder %s73, 0
    %s76 = sadd.s32 %s75, 1
    %s77 = scalar_select %p74, %s75, %s76
    %p80 = pneg %p74
    %p81 = scmp.eq.s32.totalorder %s15, 3
    %p82 = por %p80, %p81
    %p83 = scmp.ne.s32.totalorder %s75, %s78
    %p84 = scmp.eq.s32.totalorder %s15, 0
    %p85 = por %p83, %p84
    %p86 = scmp.ne.s32.totalorder %s75, %s78
    %p87 = scmp.eq.s32.totalorder %s20, 3
    %p88 = por %p86, %p87
    %p89 = scmp.ne.s32.totalorder %s78, %s79
    %p90 = scmp.eq.s32.totalorder %s20, 0
    %p91 = por %p89, %p90
    %p92 = scmp.ne.s32.totalorder %s78, %s79
    %p93 = scmp.eq.s32.totalorder %s21, 3
    %p94 = por %p92, %p93
    %p96 = scmp.ne.s32.totalorder %s79, %s95
    %p97 = scmp.eq.s32.totalorder %s21, 0
    %p98 = por %p96, %p97
    %s99 = sadd.s32 %s23, 1
    %s100 = smul.u32 %s99, 8
    %p101 = scmp.lt.s32.totalorder %s100, 15
    %s102 = scalar_select %p101, %s100, 15
    %s103 = sadd.s32 %s30, 1
    %s104 = smul.u32 %s103, 8
    %p105 = scmp.lt.s32.totalorder %s104, 15
    %s106 = scalar_select %p105, %s104, 15
    %s107 = ssub.s32 %s22, %s34
    %s108 = ssub.s32 %s102, %s106
    %s109 = sor.u32 %s107, %s108
    %p110 = scmp.eq.s32.totalorder %s109, 0
    %s112 = sadd.s32 %s111, 1
    %s113 = scalar_select %p110, %s111, %s112
    %p116 = pneg %p110
    %p117 = scmp.eq.s32.totalorder %s15, 3
    %p118 = por %p116, %p117
    %p119 = scmp.ne.s32.totalorder %s111, %s114
    %p120 = scmp.eq.s32.totalorder %s15, 0
    %p121 = por %p119, %p120
    %p122 = scmp.ne.s32.totalorder %s111, %s114
    %p123 = scmp.eq.s32.totalorder %s20, 3
    %p124 = por %p122, %p123
    %p125 = scmp.ne.s32.totalorder %s114, %s115
    %p126 = scmp.eq.s32.totalorder %s20, 0
    %p127 = por %p125, %p126
    %p128 = scmp.ne.s32.totalorder %s114, %s115
    %p129 = scmp.eq.s32.totalorder %s21, 3
    %p130 = por %p128, %p129
    %p132 = scmp.ne.s32.totalorder %s115, %s131
    %p133 = scmp.eq.s32.totalorder %s21, 0
    %p134 = por %p132, %p133
    %s136 = sadd.s32 %s135, 1
    %p139 = scmp.eq.s32.totalorder %s15, 3
    %p140 = scmp.ne.s32.totalorder %s135, %s137
    %p141 = scmp.eq.s32.totalorder %s15, 0
    %p142 = por %p140, %p141
    %p143 = scmp.ne.s32.totalorder %s135, %s137
    %p144 = scmp.eq.s32.totalorder %s20, 3
    %p145 = por %p143, %p144
    %p146 = scmp.ne.s32.totalorder %s137, %s138
    %p147 = scmp.eq.s32.totalorder %s20, 0
    %p148 = por %p146, %p147
    %p149 = scmp.ne.s32.totalorder %s137, %s138
    %p150 = scmp.eq.s32.totalorder %s21, 3
    %p151 = por %p149, %p150
    %p153 = scmp.ne.s32.totalorder %s138, %s152
    %p154 = scmp.eq.s32.totalorder %s21, 0
    %p155 = por %p153, %p154
    %s157 = sadd.s32 %s156, 1
    %p160 = scmp.eq.s32.totalorder %s15, 3
    %p161 = scmp.ne.s32.totalorder %s156, %s158
    %p162 = scmp.eq.s32.totalorder %s15, 0
    %p163 = por %p161, %p162
    %p164 = scmp.ne.s32.totalorder %s156, %s158
    %p165 = scmp.eq.s32.totalorder %s20, 3
    %p166 = por %p164, %p165
    %p167 = scmp.ne.s32.totalorder %s158, %s159
    %p168 = scmp.eq.s32.totalorder %s20, 0
    %p169 = por %p167, %p168
    %p170 = scmp.ne.s32.totalorder %s158, %s159
    %p171 = scmp.eq.s32.totalorder %s21, 3
    %p172 = por %p170, %p171
    %p174 = scmp.ne.s32.totalorder %s159, %s173
    %p175 = scmp.eq.s32.totalorder %s21, 0
    %p176 = por %p174, %p175
    %s178 = sadd.s32 %s177, 1
    %p181 = scmp.eq.s32.totalorder %s15, 3
    %p182 = scmp.ne.s32.totalorder %s177, %s179
    %p183 = scmp.eq.s32.totalorder %s15, 0
    %p184 = por %p182, %p183
    %p185 = scmp.ne.s32.totalorder %s177, %s179
    %p186 = scmp.eq.s32.totalorder %s20, 3
    %p187 = por %p185, %p186
    %p188 = scmp.ne.s32.totalorder %s179, %s180
    %p189 = scmp.eq.s32.totalorder %s20, 0
    %p190 = por %p188, %p189
    %p191 = scmp.ne.s32.totalorder %s179, %s180
    %p192 = scmp.eq.s32.totalorder %s21, 3
    %p193 = por %p191, %p192
    %p195 = scmp.ne.s32.totalorder %s180, %s194
    %p196 = scmp.eq.s32.totalorder %s21, 0
    %p197 = por %p195, %p196
    %s199 = sadd.s32 %s198, 1
    %p202 = scmp.eq.s32.totalorder %s15, 3
    %p203 = scmp.ne.s32.totalorder %s198, %s200
    %p204 = scmp.eq.s32.totalorder %s15, 0
    %p205 = por %p203, %p204
    %p206 = scmp.ne.s32.totalorder %s198, %s200
    %p207 = scmp.eq.s32.totalorder %s20, 3
    %p208 = por %p206, %p207
    %p209 = scmp.ne.s32.totalorder %s200, %s201
    %p210 = scmp.eq.s32.totalorder %s20, 0
    %p211 = por %p209, %p210
    %p212 = scmp.ne.s32.totalorder %s200, %s201
    %p213 = scmp.eq.s32.totalorder %s21, 3
    %p214 = por %p212, %p213
    %p216 = scmp.ne.s32.totalorder %s201, %s215
    %p217 = scmp.eq.s32.totalorder %s21, 0
    %p218 = por %p216, %p217
    %s220 = sadd.s32 %s219, 1
    %p223 = scmp.eq.s32.totalorder %s15, 3
    %p224 = scmp.ne.s32.totalorder %s219, %s221
    %p225 = scmp.eq.s32.totalorder %s15, 0
    %p226 = por %p224, %p225
    %p227 = scmp.ne.s32.totalorder %s219, %s221
    %p228 = scmp.eq.s32.totalorder %s20, 3
    %p229 = por %p227, %p228
    %p230 = scmp.ne.s32.totalorder %s221, %s222
    %p231 = scmp.eq.s32.totalorder %s20, 0
    %p232 = por %p230, %p231
    %p233 = scmp.ne.s32.totalorder %s221, %s222
    %p234 = scmp.eq.s32.totalorder %s21, 3
    %p235 = por %p233, %p234
    %p237 = scmp.ne.s32.totalorder %s222, %s236
    %p238 = scmp.eq.s32.totalorder %s21, 0
    %p239 = por %p237, %p238
    %s241 = sadd.s32 %s240, 1
    %p244 = scmp.eq.s32.totalorder %s15, 3
    %p245 = scmp.ne.s32.totalorder %s240, %s242
    %p246 = scmp.eq.s32.totalorder %s15, 0
    %p247 = por %p245, %p246
    %p248 = scmp.ne.s32.totalorder %s240, %s242
    %p249 = scmp.eq.s32.totalorder %s20, 3
    %p250 = por %p248, %p249
    %p251 = scmp.ne.s32.totalorder %s242, %s243
    %p252 = scmp.eq.s32.totalorder %s20, 0
    %p253 = por %p251, %p252
    %p254 = scmp.ne.s32.totalorder %s242, %s243
    %p255 = scmp.eq.s32.totalorder %s21, 3
    %p256 = por %p254, %p255
    %p258 = scmp.ne.s32.totalorder %s243, %s257
    %p259 = scmp.eq.s32.totalorder %s21, 0
    %p260 = por %p258, %p259
    %s261 = ssub.s32 %s22, %s34
    %s262 = ssub.s32 %s23, %s30
    %s263 = sor.u32 %s261, %s262
    %p264 = scmp.eq.s32.totalorder %s263, 0
    %s266 = sadd.s32 %s265, 1
    %s267 = scalar_select %p264, %s265, %s266
    %p270 = pneg %p264
    %p271 = scmp.eq.s32.totalorder %s15, 3
    %p272 = por %p270, %p271
    %p273 = scmp.ne.s32.totalorder %s265, %s268
    %p274 = scmp.eq.s32.totalorder %s15, 0
    %p275 = por %p273, %p274
    %p276 = scmp.ne.s32.totalorder %s265, %s268
    %p277 = scmp.eq.s32.totalorder %s20, 3
    %p278 = por %p276, %p277
    %p279 = scmp.ne.s32.totalorder %s268, %s269
    %p280 = scmp.eq.s32.totalorder %s20, 0
    %p281 = por %p279, %p280
    %p282 = scmp.ne.s32.totalorder %s268, %s269
    %p283 = scmp.eq.s32.totalorder %s21, 3
    %p284 = por %p282, %p283
    %p286 = scmp.ne.s32.totalorder %s269, %s285
    %p287 = scmp.eq.s32.totalorder %s21, 0
    %p288 = por %p286, %p287
    %p289 = scmp.le.s32.totalorder 1, %s15
    %p290 = scmp.lt.s32.totalorder %s15, 5
    %p291 = pnand %p289, %p290
    %p292 = pneg %p291
    // Predicated region
    $region9: #{inverted_residual.1} parent=5 // pred_check
      _
    $region10: #{inverted_residual.1} parent=5 // pred_check_branch
      %294 = sbr.rel (%p291) target = $region12
    $region11: #{inverted_residual.1} parent=5 // pred_region
      %s295 = ssub.s32 %s15, 1
      // Predicated region
      $region13: #{inverted_residual.1} parent=11 // pred_check
        %p296 = pneg %p148
      $region14: #{inverted_residual.1} parent=11 // pred_check_branch
        %298 = sbr.rel (%p296) target = $region16
      $region15: #{inverted_residual.1} parent=11 // pred_region
        _
      $region16: #{inverted_residual.1} parent=11 // pred_fallthru
        _
      // Predicated region
      $region17: #{inverted_residual.1} parent=11 // pred_check
        %p299 = pneg %p169
      $region18: #{inverted_residual.1} parent=11 // pred_check_branch
        %301 = sbr.rel (%p299) target = $region20
      $region19: #{inverted_residual.1} parent=11 // pred_region
        _
      $region20: #{inverted_residual.1} parent=11 // pred_fallthru
        _
      // Predicated region
      $region21: #{inverted_residual.1} parent=11 // pred_check
        %p302 = pneg %p190
      $region22: #{inverted_residual.1} parent=11 // pred_check_branch
        %304 = sbr.rel (%p302) target = $region24
      $region23: #{inverted_residual.1} parent=11 // pred_region
        _
      $region24: #{inverted_residual.1} parent=11 // pred_fallthru
        _
      // Predicated region
      $region25: #{inverted_residual.1} parent=11 // pred_check
        %p305 = pneg %p211
      $region26: #{inverted_residual.1} parent=11 // pred_check_branch
        %307 = sbr.rel (%p305) target = $region28
      $region27: #{inverted_residual.1} parent=11 // pred_region
        _
      $region28: #{inverted_residual.1} parent=11 // pred_fallthru
        _
      // Predicated region
      $region29: #{inverted_residual.1} parent=11 // pred_check
        %p308 = pneg %p232
      $region30: #{inverted_residual.1} parent=11 // pred_check_branch
        %310 = sbr.rel (%p308) target = $region32
      $region31: #{inverted_residual.1} parent=11 // pred_region
        _
      $region32: #{inverted_residual.1} parent=11 // pred_fallthru
        _
      // Predicated region
      $region33: #{inverted_residual.1} parent=11 // pred_check
        %p311 = pneg %p253
      $region34: #{inverted_residual.1} parent=11 // pred_check_branch
        %313 = sbr.rel (%p311) target = $region36
      $region35: #{inverted_residual.1} parent=11 // pred_region
        _
      $region36: #{inverted_residual.1} parent=11 // pred_fallthru
        _
    $region12: #{inverted_residual.1} parent=5 // pred_fallthru
      _
    %p314 = scmp.lt.s32.totalorder %s15, 4
    // Predicated region
    $region37: #{inverted_residual.1} parent=5 // pred_check
      %p315 = pneg %p314
    $region38: #{inverted_residual.1} parent=5 // pred_check_branch
      %317 = sbr.rel (%p315) target = $region40
    $region39: #{inverted_residual.1} parent=5 // pred_region
      // Predicated region
      $region41: #{inverted_residual.1} parent=39 // pred_check
        %p318 = pneg %p49
      $region42: #{inverted_residual.1} parent=39 // pred_check_branch
        %320 = sbr.rel (%p318) target = $region44
      $region43: #{inverted_residual.1} parent=39 // pred_region
        %s321 = smul.u32 8, %s23
        %p322 = scmp.lt.s32.totalorder %s22, 1
        %s323 = scalar_select %p322, %s22, 1
        %p324 = scmp.lt.s32.totalorder %s321, 15
        %s325 = scalar_select %p324, %s321, 15
        %s326 = smul.addr %s325, 2
        %s327 = smul.addr %s323, 32
        %s328 = sadd.s32 %s326, %s327
        %s329 = smul.addr %s328, 4
        %s330 = scalar_lea.vmem %s0, %s329
        %s331 = smul.u32 8, %s23
      $region44: #{inverted_residual.1} parent=39 // pred_fallthru
        _
      // Predicated region
      $region45: #{inverted_residual.1} parent=39 // pred_check
        %p332 = pneg %p85
      $region46: #{inverted_residual.1} parent=39 // pred_check_branch
        %334 = sbr.rel (%p332) target = $region48
      $region47: #{inverted_residual.1} parent=39 // pred_region
        %s335 = smul.u32 %s23, 8
        %s336 = ssub.s32 %s335, 1
        %p337 = scmp.gt.s32.totalorder %s336, 0
        %s338 = scalar_select %p337, %s336, 0
        %p339 = scmp.lt.s32.totalorder %s22, 1
        %s340 = scalar_select %p339, %s22, 1
        %p341 = scmp.lt.s32.totalorder %s338, 15
        %s342 = scalar_select %p341, %s338, 15
        %s343 = smul.addr %s342, 2
        %s344 = smul.addr %s340, 32
        %s345 = sadd.s32 %s343, %s344
        %s346 = smul.addr %s345, 4
        %s347 = scalar_lea.vmem %s1, %s346
        %s348 = smul.u32 %s23, 8
        %s349 = ssub.s32 %s348, 1
        %p350 = scmp.gt.s32.totalorder %s349, 0
        %s351 = scalar_select %p350, %s349, 0
      $region48: #{inverted_residual.1} parent=39 // pred_fallthru
        _
      // Predicated region
      $region49: #{inverted_residual.1} parent=39 // pred_check
        %p352 = pneg %p121
      $region50: #{inverted_residual.1} parent=39 // pred_check_branch
        %354 = sbr.rel (%p352) target = $region52
      $region51: #{inverted_residual.1} parent=39 // pred_region
        %s355 = sadd.s32 %s23, 1
        %s356 = smul.u32 %s355, 8
        %p357 = scmp.lt.s32.totalorder %s356, 15
        %s358 = scalar_select %p357, %s356, 15
        %p359 = scmp.lt.s32.totalorder %s22, 1
        %s360 = scalar_select %p359, %s22, 1
        %p361 = scmp.lt.s32.totalorder %s358, 15
        %s362 = scalar_select %p361, %s358, 15
        %s363 = smul.addr %s362, 2
        %s364 = smul.addr %s360, 32
        %s365 = sadd.s32 %s363, %s364
        %s366 = smul.addr %s365, 4
        %s367 = scalar_lea.vmem %s2, %s366
        %s368 = sadd.s32 %s23, 1
        %s369 = smul.u32 %s368, 8
        %p370 = scmp.lt.s32.totalorder %s369, 15
        %s371 = scalar_select %p370, %s369, 15
      $region52: #{inverted_residual.1} parent=39 // pred_fallthru
        _
    $region40: #{inverted_residual.1} parent=5 // pred_fallthru
      _
    %p372 = scmp.le.s32.totalorder 1, %s15
    %p373 = scmp.lt.s32.totalorder %s15, 5
    %p374 = pnand %p372, %p373
    %p375 = pneg %p374
    // Predicated region
    $region53: #{inverted_residual.1} parent=5 // pred_check
      _
    $region54: #{inverted_residual.1} parent=5 // pred_check_branch
      %377 = sbr.rel (%p374) target = $region56
    $region55: #{inverted_residual.1} parent=5 // pred_region
      %s378 = ssub.s32 %s15, 1
      %s379 = smul.u32 8, %s25
      %p380 = scmp.lt.s32.totalorder %s24, 1
      %s381 = scalar_select %p380, %s24, 1
      %p382 = scmp.lt.s32.totalorder %s379, 15
      %s383 = scalar_select %p382, %s379, 15
      %s384 = smul.addr %s383, 2
      %s385 = smul.addr %s381, 32
      %s386 = sadd.s32 %s384, %s385
      %s387 = smul.addr %s386, 4
      %s388 = scalar_lea.vmem %s0, %s387
      %p389 = pneg %p55
      %p390 = pneg %p52
      %s391 = smul.u32 %s25, 8
      %s392 = ssub.s32 %s391, 1
      %p393 = scmp.gt.s32.totalorder %s392, 0
      %s394 = scalar_select %p393, %s392, 0
      %p395 = scmp.lt.s32.totalorder %s24, 1
      %s396 = scalar_select %p395, %s24, 1
      %p397 = scmp.lt.s32.totalorder %s394, 15
      %s398 = scalar_select %p397, %s394, 15
      %s399 = smul.addr %s398, 2
      %s400 = smul.addr %s396, 32
      %s401 = sadd.s32 %s399, %s400
      %s402 = smul.addr %s401, 4
      %s403 = scalar_lea.vmem %s1, %s402
      %p404 = pneg %p91
      %p405 = pneg %p88
      %s406 = sadd.s32 %s25, 1
      %s407 = smul.u32 %s406, 8
      %p408 = scmp.lt.s32.totalorder %s407, 15
      %s409 = scalar_select %p408, %s407, 15
      %p410 = scmp.lt.s32.totalorder %s24, 1
      %s411 = scalar_select %p410, %s24, 1
      %p412 = scmp.lt.s32.totalorder %s409, 15
      %s413 = scalar_select %p412, %s409, 15
      %s414 = smul.addr %s413, 2
      %s415 = smul.addr %s411, 32
      %s416 = sadd.s32 %s414, %s415
      %s417 = smul.addr %s416, 4
      %s418 = scalar_lea.vmem %s2, %s417
      %p419 = pneg %p127
      %p420 = pneg %p124
      %p421 = pneg %p148
      %p422 = pneg %p145
      %p423 = pneg %p169
      %p424 = pneg %p166
      %p425 = pneg %p190
      %p426 = pneg %p187
      %p427 = pneg %p211
      %p428 = pneg %p208
      %p429 = pneg %p232
      %p430 = pneg %p229
      %p431 = pneg %p253
      %p432 = pneg %p250
      %p433 = pneg %p281
      %p434 = pneg %p278
      %s435 = smul.u32 8, %s25
      %p436 = scmp.lt.s32.totalorder %s24, 1
      %s437 = scalar_select %p436, %s24, 1
      %p438 = scmp.lt.s32.totalorder %s435, 15
      %s439 = scalar_select %p438, %s435, 15
      %s440 = smul.addr %s439, 2
      %s441 = smul.addr %s437, 32
      %s442 = sadd.s32 %s440, %s441
      %s443 = smul.addr %s442, 4
      %s444 = scalar_lea.vmem %s9, %s443
      %s445 = smul.u32 8, %s25
      %p446 = scmp.lt.s32.totalorder %s24, 1
      %s447 = scalar_select %p446, %s24, 1
      %p448 = scmp.lt.s32.totalorder %s445, 15
      %s449 = scalar_select %p448, %s445, 15
      %s450 = smul.addr %s449, 2
      %s451 = smul.addr %s447, 32
      %s452 = sadd.s32 %s450, %s451
      %s453 = smul.addr %s452, 4
      %s454 = scalar_lea.vmem %s0, %s453
      %s455 = smul.u32 8, %s25
      %s456 = smul.u32 %s25, 8
      %s457 = ssub.s32 %s456, 1
      %p458 = scmp.gt.s32.totalorder %s457, 0
      %s459 = scalar_select %p458, %s457, 0
      %p460 = scmp.lt.s32.totalorder %s24, 1
      %s461 = scalar_select %p460, %s24, 1
      %p462 = scmp.lt.s32.totalorder %s459, 15
      %s463 = scalar_select %p462, %s459, 15
      %s464 = smul.addr %s463, 2
      %s465 = smul.addr %s461, 32
      %s466 = sadd.s32 %s464, %s465
      %s467 = smul.addr %s466, 4
      %s468 = scalar_lea.vmem %s1, %s467
      %s469 = smul.u32 %s25, 8
      %s470 = ssub.s32 %s469, 1
      %p471 = scmp.gt.s32.totalorder %s470, 0
      %s472 = scalar_select %p471, %s470, 0
      %s473 = sadd.s32 %s25, 1
      %s474 = smul.u32 %s473, 8
      %p475 = scmp.lt.s32.totalorder %s474, 15
      %s476 = scalar_select %p475, %s474, 15
      %p477 = scmp.lt.s32.totalorder %s24, 1
      %s478 = scalar_select %p477, %s24, 1
      %p479 = scmp.lt.s32.totalorder %s476, 15
      %s480 = scalar_select %p479, %s476, 15
      %s481 = smul.addr %s480, 2
      %s482 = smul.addr %s478, 32
      %s483 = sadd.s32 %s481, %s482
      %s484 = smul.addr %s483, 4
      %s485 = scalar_lea.vmem %s2, %s484
      %s486 = sadd.s32 %s25, 1
      %s487 = smul.u32 %s486, 8
      %p488 = scmp.lt.s32.totalorder %s487, 15
      %s489 = scalar_select %p488, %s487, 15
      %s490 = smul.u32 8, %s25
      %p491 = scmp.lt.s32.totalorder %s24, 1
      %s492 = scalar_select %p491, %s24, 1
      %p493 = scmp.lt.s32.totalorder %s490, 15
      %s494 = scalar_select %p493, %s490, 15
      %s495 = smul.addr %s494, 2
      %s496 = smul.addr %s492, 32
      %s497 = sadd.s32 %s495, %s496
      %s498 = smul.addr %s497, 4
      %s499 = scalar_lea.vmem %s9, %s498
      %s500 = smul.u32 8, %s25
      %v502 = vld [vmem:[%s468] sm:$0xf]
      %v503 = vld [vmem:[%s468 + $0x4] sm:$0xf]
      %v504 = vld [vmem:[%s454] sm:$0xf]
      %v505 = vld [vmem:[%s454 + $0x4] sm:$0xf]
      %v506 = vld [vmem:[%s454 + $0x8] sm:$0xf]
      %v507 = vld [vmem:[%s454 + $0xc] sm:$0xf]
      %v508 = vld [vmem:[%s454 + $0x10] sm:$0xf]
      %v509 = vld [vmem:[%s454 + $0x14] sm:$0xf]
      %v510 = vld [vmem:[%s454 + $0x18] sm:$0xf]
      %v511 = vld [vmem:[%s454 + $0x1c] sm:$0xf]
      %v512 = vld [vmem:[%s454 + $0x20] sm:$0xf]
      %v513 = vld [vmem:[%s454 + $0x24] sm:$0xf]
      %v514 = vld [vmem:[%s454 + $0x28] sm:$0xf]
      %v515 = vld [vmem:[%s454 + $0x2c] sm:$0xf]
      %v516 = vld [vmem:[%s454 + $0x30] sm:$0xf]
      %v517 = vld [vmem:[%s454 + $0x34] sm:$0xf]
      %v518 = vld [vmem:[%s454 + $0x38] sm:$0xf]
      %v519 = vld [vmem:[%s454 + $0x3c] sm:$0xf]
      %v520 = vld [vmem:[%s485] sm:$0xf]
      %v521 = vld [vmem:[%s485 + $0x4] sm:$0xf]
      %v522 = vld [vmem:[%s3] sm:$0xf]
      %v523 = vld [vmem:[%s3 + $0x4] sm:$0xf]
      %v524 = vld [vmem:[%s3 + $0x8] sm:$0xf]
      %v525 = vld [vmem:[%s3 + $0xc] sm:$0xf]
      %v526 = vld [vmem:[%s3 + $0x10] sm:$0xf]
      %v527 = vld [vmem:[%s3 + $0x14] sm:$0xf]
      %v528 = vld [vmem:[%s3 + $0x18] sm:$0xf]
      %v529 = vld [vmem:[%s3 + $0x1c] sm:$0xf]
      %v530 = vld [vmem:[%s3 + $0x20] sm:$0xf]
      %v531 = vld [vmem:[%s3 + $0x24] sm:$0xf]
      %v532 = vld [vmem:[%s3 + $0x28] sm:$0xf]
      %v533 = vld [vmem:[%s3 + $0x2c] sm:$0xf]
      %v534 = vld [vmem:[%s3 + $0x30] sm:$0xf]
      %v535 = vld [vmem:[%s3 + $0x34] sm:$0xf]
      %v536 = vld [vmem:[%s3 + $0x38] sm:$0xf]
      %v537 = vld [vmem:[%s3 + $0x3c] sm:$0xf]
      %v538 = vld [vmem:[%s4] sm:$0x1]
      %v540 = vlaneseq
      %v541 = vshrl.u32 %v540, 7
      %v542 = vsub.s32 0, %v541
      %v543 = vrot.slane %v538, %v542
      %v565 = vunpack.c.l.b16 %v502
      %v566 = vunpack.c.l.b16 %v503
      %v567 = vunpack.c.l.b16 %v504
      %v568 = vunpack.c.l.b16 %v505
      %v569 = vunpack.c.l.b16 %v506
      %v570 = vunpack.c.l.b16 %v507
      %v571 = vunpack.c.l.b16 %v508
      %v572 = vunpack.c.l.b16 %v509
      %v573 = vunpack.c.l.b16 %v510
      %v574 = vunpack.c.l.b16 %v511
      %v575 = vunpack.c.l.b16 %v512
      %v576 = vunpack.c.l.b16 %v513
      %v577 = vunpack.c.l.b16 %v514
      %v578 = vunpack.c.l.b16 %v515
      %v579 = vunpack.c.l.b16 %v516
      %v580 = vunpack.c.l.b16 %v517
      %v581 = vunpack.c.l.b16 %v518
      %v582 = vunpack.c.l.b16 %v519
      %v583 = vunpack.c.l.b16 %v520
      %v584 = vunpack.c.l.b16 %v521
      %v585 = vpack.c.b16 %v566, %v565
      %v586 = vpack.c.b16 %v568, %v567
      %v587 = vpack.c.b16 %v570, %v569
      %v588 = vpack.c.b16 %v572, %v571
      %v589 = vpack.c.b16 %v574, %v573
      %v590 = vpack.c.b16 %v576, %v575
      %v591 = vpack.c.b16 %v578, %v577
      %v592 = vpack.c.b16 %v580, %v579
      %v593 = vpack.c.b16 %v582, %v581
      %v594 = vpack.c.b16 %v584, %v583
      %v621 = vunpack.c.l.b16 %v522
      %v622 = vunpack.c.l.b16 %v523
      %v623 = vunpack.c.l.b16 %v524
      %v624 = vunpack.c.l.b16 %v525
      %v625 = vunpack.c.l.b16 %v526
      %v626 = vunpack.c.l.b16 %v527
      %v627 = vunpack.c.l.b16 %v528
      %v628 = vunpack.c.l.b16 %v529
      %v629 = vunpack.c.l.b16 %v530
      %v630 = vunpack.c.l.b16 %v531
      %v631 = vunpack.c.l.b16 %v532
      %v632 = vunpack.c.l.b16 %v533
      %v633 = vunpack.c.l.b16 %v534
      %v634 = vunpack.c.l.b16 %v535
      %v635 = vunpack.c.l.b16 %v536
      %v636 = vunpack.c.l.b16 %v537
      %v637 = vpack.c.b16 %v622, %v621
      %v638 = vpack.c.b16 %v624, %v623
      %v639 = vpack.c.b16 %v626, %v625
      %v640 = vpack.c.b16 %v628, %v627
      %v641 = vpack.c.b16 %v630, %v629
      %v642 = vpack.c.b16 %v632, %v631
      %v643 = vpack.c.b16 %v634, %v633
      %v644 = vpack.c.b16 %v636, %v635
      %653 = vmatprep.subr.bf16.mxu0 0
      %654 = vmatpush1.bf16.msra.mxu0 %v644
      %655 = vmatprep.subr.bf16.mxu0 0
      %656 = vmatpush1.bf16.msra.mxu0 %v643
      %657 = vmatprep.subr.bf16.mxu0 0
      %658 = vmatpush1.bf16.msra.mxu0 %v642
      %659 = vmatprep.subr.bf16.mxu0 0
      %660 = vmatpush1.bf16.msra.mxu0 %v641
      %661 = vmatprep.subr.bf16.mxu0 0
      %662 = vmatpush1.bf16.msra.mxu0 %v640
      %663 = vmatprep.subr.bf16.mxu0 0
      %664 = vmatpush1.bf16.msra.mxu0 %v639
      %665 = vmatprep.subr.bf16.mxu0 0
      %666 = vmatpush1.bf16.msra.mxu0 %v638
      %667 = vmatprep.subr.bf16.mxu0 0
      %668 = vmatpush1.bf16.msra.mxu0 %v637
      %669 = vmatprep.subr.bf16.mxu0 0
      %670 = vmatpush2.bf16.msra.mxu0 0
      %671 = vmatprep.subr.bf16.mxu0 0
      %672 = vmatpush2.bf16.msra.mxu0 0
      %673 = vmatprep.subr.bf16.mxu0 0
      %674 = vmatpush2.bf16.msra.mxu0 0
      %675 = vmatprep.subr.bf16.mxu0 0
      %676 = vmatpush2.bf16.msra.mxu0 0
      %677 = vmatprep.subr.bf16.mxu0 0
      %678 = vmatpush2.bf16.msra.mxu0 0
      %679 = vmatprep.subr.bf16.mxu0 0
      %680 = vmatpush2.bf16.msra.mxu0 0
      %681 = vmatprep.subr.bf16.mxu0 0
      %682 = vmatpush2.bf16.msra.mxu0 0
      %683 = vmatprep.subr.bf16.mxu0 0
      %684 = vmatpush2.bf16.msra.mxu0 0
      %685 = vmatprep.mubr.bf16.mxu0 0
      %686 = vmatmul.mubr.bf16.gmra.mxu0 %v585
      %v687 = vpop.f32.mrf.mxu0
      %v688 = vadd.f32 %v543, %v687
      %v689 = vpop.f32.mrf.mxu0
      %v690 = vpop.f32.mrf.mxu0
      %v691 = vadd.f32 %v543, %v690
      %v692 = vpop.f32.mrf.mxu0
      %693 = vmatprep.mubr.bf16.mxu0 0
      %694 = vmatmul.mubr.bf16.gmra.mxu0 %v586
      %v695 = vpop.f32.mrf.mxu0
      %v696 = vadd.f32 %v543, %v695
      %v697 = vpop.f32.mrf.mxu0
      %v698 = vpop.f32.mrf.mxu0
      %v699 = vadd.f32 %v543, %v698
      %v700 = vpop.f32.mrf.mxu0
      %701 = vmatprep.mubr.bf16.mxu0 0
      %702 = vmatmul.mubr.bf16.gmra.mxu0 %v587
      %v703 = vpop.f32.mrf.mxu0
      %v704 = vadd.f32 %v543, %v703
      %v705 = vpop.f32.mrf.mxu0
      %v706 = vpop.f32.mrf.mxu0
      %v707 = vadd.f32 %v543, %v706
      %v708 = vpop.f32.mrf.mxu0
      %709 = vmatprep.mubr.bf16.mxu0 0
      %710 = vmatmul.mubr.bf16.gmra.mxu0 %v588
      %v711 = vpop.f32.mrf.mxu0
      %v712 = vadd.f32 %v543, %v711
      %v713 = vpop.f32.mrf.mxu0
      %v714 = vpop.f32.mrf.mxu0
      %v715 = vadd.f32 %v543, %v714
      %v716 = vpop.f32.mrf.mxu0
      %717 = vmatprep.mubr.bf16.mxu0 0
      %718 = vmatmul.mubr.bf16.gmra.mxu0 %v589
      %v719 = vpop.f32.mrf.mxu0
      %v720 = vadd.f32 %v543, %v719
      %v721 = vpop.f32.mrf.mxu0
      %v722 = vpop.f32.mrf.mxu0
      %v723 = vadd.f32 %v543, %v722
      %v724 = vpop.f32.mrf.mxu0
      %725 = vmatprep.mubr.bf16.mxu0 0
      %726 = vmatmul.mubr.bf16.gmra.mxu0 %v590
      %v727 = vpop.f32.mrf.mxu0
      %v728 = vadd.f32 %v543, %v727
      %v729 = vpop.f32.mrf.mxu0
      %v730 = vpop.f32.mrf.mxu0
      %v731 = vadd.f32 %v543, %v730
      %v732 = vpop.f32.mrf.mxu0
      %733 = vmatprep.mubr.bf16.mxu0 0
      %734 = vmatmul.mubr.bf16.gmra.mxu0 %v591
      %v735 = vpop.f32.mrf.mxu0
      %v736 = vadd.f32 %v543, %v735
      %v737 = vpop.f32.mrf.mxu0
      %v738 = vpop.f32.mrf.mxu0
      %v739 = vadd.f32 %v543, %v738
      %v740 = vpop.f32.mrf.mxu0
      %741 = vmatprep.mubr.bf16.mxu0 0
      %742 = vmatmul.mubr.bf16.gmra.mxu0 %v592
      %v743 = vpop.f32.mrf.mxu0
      %v744 = vadd.f32 %v543, %v743
      %v745 = vpop.f32.mrf.mxu0
      %v746 = vpop.f32.mrf.mxu0
      %v747 = vadd.f32 %v543, %v746
      %v748 = vpop.f32.mrf.mxu0
      %749 = vmatprep.mubr.bf16.mxu0 0
      %750 = vmatmul.mubr.bf16.gmra.mxu0 %v593
      %v751 = vpop.f32.mrf.mxu0
      %v752 = vadd.f32 %v543, %v751
      %v753 = vpop.f32.mrf.mxu0
      %v754 = vpop.f32.mrf.mxu0
      %v755 = vadd.f32 %v543, %v754
      %v756 = vpop.f32.mrf.mxu0
      %757 = vmatprep.mubr.bf16.mxu0 0
      %758 = vmatmul.mubr.bf16.gmra.mxu0 %v594
      %v759 = vpop.f32.mrf.mxu0
      %v760 = vadd.f32 %v543, %v759
      %v761 = vpop.f32.mrf.mxu0
      %v762 = vpop.f32.mrf.mxu0
      %v763 = vadd.f32 %v543, %v762
      %v764 = vpop.f32.mrf.mxu0
      %765 = vdwg.mxu0
      %v766 = vmax.f32 %v688, 0.0
      %v767 = vmax.f32 %v691, 0.0
      %v768 = vmax.f32 %v696, 0.0
      %v769 = vmax.f32 %v699, 0.0
      %v770 = vmax.f32 %v704, 0.0
      %v771 = vmax.f32 %v707, 0.0
      %v772 = vmax.f32 %v712, 0.0
      %v773 = vmax.f32 %v715, 0.0
      %v774 = vmax.f32 %v720, 0.0
      %v775 = vmax.f32 %v723, 0.0
      %v776 = vmax.f32 %v728, 0.0
      %v777 = vmax.f32 %v731, 0.0
      %v778 = vmax.f32 %v736, 0.0
      %v779 = vmax.f32 %v739, 0.0
      %v780 = vmax.f32 %v744, 0.0
      %v781 = vmax.f32 %v747, 0.0
      %v782 = vmax.f32 %v752, 0.0
      %v783 = vmax.f32 %v755, 0.0
      %v784 = vmax.f32 %v760, 0.0
      %v785 = vmax.f32 %v763, 0.0
      %v786 = vmin.f32 %v766, 6.0
      %v787 = vmin.f32 %v767, 6.0
      %v788 = vmin.f32 %v768, 6.0
      %v789 = vmin.f32 %v769, 6.0
      %v790 = vmin.f32 %v770, 6.0
      %v791 = vmin.f32 %v771, 6.0
      %v792 = vmin.f32 %v772, 6.0
      %v793 = vmin.f32 %v773, 6.0
      %v794 = vmin.f32 %v774, 6.0
      %v795 = vmin.f32 %v775, 6.0
      %v796 = vmin.f32 %v776, 6.0
      %v797 = vmin.f32 %v777, 6.0
      %v798 = vmin.f32 %v778, 6.0
      %v799 = vmin.f32 %v779, 6.0
      %v800 = vmin.f32 %v780, 6.0
      %v801 = vmin.f32 %v781, 6.0
      %v802 = vmin.f32 %v782, 6.0
      %v803 = vmin.f32 %v783, 6.0
      %v804 = vmin.f32 %v784, 6.0
      %v805 = vmin.f32 %v785, 6.0
      %p806 = scmp.eq.s32.totalorder %s25, 0
      %s807 = scalar_select %p806, 0.0, 1.0
      %p808 = scmp.eq.s32.totalorder %s25, 1
      %s809 = scalar_select %p808, 0.0, 1.0
      %v810 = vstv %s807
      %v811 = vmul.f32 %v786, %v810
      %v812 = vmul.f32 %v787, %v810
      %813 = vst [vmem:[#allocation2] sm:$0xff] %v811
      %814 = vst [vmem:[#allocation2 + $0x8] sm:$0xff] %v812
      %s815 = scalar_lea.vmem [#allocation2], 16
      %816 = vst [vmem:[%s815] sm:$0xff] %v788
      %817 = vst [vmem:[%s815 + $0x8] sm:$0xff] %v789
      %818 = vst [vmem:[%s815 + $0x10] sm:$0xff] %v790
      %819 = vst [vmem:[%s815 + $0x18] sm:$0xff] %v791
      %820 = vst [vmem:[%s815 + $0x20] sm:$0xff] %v792
      %821 = vst [vmem:[%s815 + $0x28] sm:$0xff] %v793
      %822 = vst [vmem:[%s815 + $0x30] sm:$0xff] %v794
      %823 = vst [vmem:[%s815 + $0x38] sm:$0xff] %v795
      %824 = vst [vmem:[%s815 + $0x40] sm:$0xff] %v796
      %825 = vst [vmem:[%s815 + $0x48] sm:$0xff] %v797
      %826 = vst [vmem:[%s815 + $0x50] sm:$0xff] %v798
      %827 = vst [vmem:[%s815 + $0x58] sm:$0xff] %v799
      %828 = vst [vmem:[%s815 + $0x60] sm:$0xff] %v800
      %829 = vst [vmem:[%s815 + $0x68] sm:$0xff] %v801
      %830 = vst [vmem:[%s815 + $0x70] sm:$0xff] %v802
      %831 = vst [vmem:[%s815 + $0x78] sm:$0xff] %v803
      %v832 = vstv %s809
      %v833 = vmul.f32 %v804, %v832
      %v834 = vmul.f32 %v805, %v832
      %s835 = scalar_lea.vmem [#allocation2], 144
      %836 = vst [vmem:[%s835] sm:$0xff] %v833
      %837 = vst [vmem:[%s835 + $0x8] sm:$0xff] %v834
      %v838 = vlaneseq
      %v839 = vshrl.u32 %v838, 7
      %v840 = vadd.s32 %v839, 8
      %vm841 = vcmp.gt.s32.totalorder %v839, 0
      %vm842 = vcmp.gt.s32.totalorder %v840, 0
      %vm843 = vcmp.lt.s32.totalorder %v839, 15
      %vm844 = vcmp.lt.s32.totalorder %v840, 15
      %v845 = vld [vmem:[#allocation2] sm:$0xff]
      %v846 = vld [vmem:[#allocation2 + $0x8] sm:$0xff]
      %v847 = vld [vmem:[#allocation2 + $0x10] sm:$0xff]
      %v848 = vld [vmem:[#allocation2 + $0x18] sm:$0xff]
      %v849 = vld [vmem:[#allocation2 + $0x20] sm:$0xff]
      %v850 = vld [vmem:[#allocation2 + $0x28] sm:$0xff]
      %v851 = vld [vmem:[#allocation2 + $0x30] sm:$0xff]
      %v852 = vld [vmem:[#allocation2 + $0x38] sm:$0xff]
      %v853 = vld [vmem:[#allocation2 + $0x40] sm:$0xff]
      %v854 = vld [vmem:[#allocation2 + $0x48] sm:$0xff]
      %v855 = vld [vmem:[#allocation2 + $0x50] sm:$0xff]
      %v856 = vld [vmem:[#allocation2 + $0x58] sm:$0xff]
      %v857 = vld [vmem:[#allocation2 + $0x60] sm:$0xff]
      %v858 = vld [vmem:[#allocation2 + $0x68] sm:$0xff]
      %v859 = vld [vmem:[#allocation2 + $0x70] sm:$0xff]
      %v860 = vld [vmem:[#allocation2 + $0x78] sm:$0xff]
      %s861 = scalar_lea.vmem %s5, 1
      %v862 = vld [vmem:[%s861] sm:$0x1]
      %v864 = vlaneseq
      %v865 = vshrl.u32 %v864, 7
      %v866 = vsub.s32 0, %v865
      %v867 = vrot.slane %v862, %v866
      %v869 = vmul.f32 %v845, %v867
      %v870 = vmul.f32 %v846, %v867
      %v871 = vmul.f32 %v847, %v867
      %v872 = vmul.f32 %v848, %v867
      %v873 = vmul.f32 %v849, %v867
      %v874 = vmul.f32 %v850, %v867
      %v875 = vmul.f32 %v851, %v867
      %v876 = vmul.f32 %v852, %v867
      %v877 = vmul.f32 %v853, %v867
      %v878 = vmul.f32 %v854, %v867
      %v879 = vmul.f32 %v855, %v867
      %v880 = vmul.f32 %v856, %v867
      %v881 = vmul.f32 %v857, %v867
      %v882 = vmul.f32 %v858, %v867
      %v883 = vmul.f32 %v859, %v867
      %v884 = vmul.f32 %v860, %v867
      %v885 = vadd.f32 %v869, 0.0
      %v886 = vadd.f32 %v870, 0.0
      %v887 = vadd.f32 %v871, 0.0
      %v888 = vadd.f32 %v872, 0.0
      %v889 = vadd.f32 %v873, 0.0
      %v890 = vadd.f32 %v874, 0.0
      %v891 = vadd.f32 %v875, 0.0
      %v892 = vadd.f32 %v876, 0.0
      %v893 = vadd.f32 %v877, 0.0
      %v894 = vadd.f32 %v878, 0.0
      %v895 = vadd.f32 %v879, 0.0
      %v896 = vadd.f32 %v880, 0.0
      %v897 = vadd.f32 %v881, 0.0
      %v898 = vadd.f32 %v882, 0.0
      %v899 = vadd.f32 %v883, 0.0
      %v900 = vadd.f32 %v884, 0.0
      %v901 = vrot.slane %v845, 7
      %v902 = vrot.slane %v847, 7
      %v903 = vrot.slane %v849, 7
      %v904 = vrot.slane %v851, 7
      %v905 = vrot.slane %v853, 7
      %v906 = vrot.slane %v855, 7
      %v907 = vrot.slane %v857, 7
      %v908 = vrot.slane %v859, 7
      %v909 = vrot.slane %v846, 7
      %v910 = vrot.slane %v848, 7
      %v911 = vrot.slane %v850, 7
      %v912 = vrot.slane %v852, 7
      %v913 = vrot.slane %v854, 7
      %v914 = vrot.slane %v856, 7
      %v915 = vrot.slane %v858, 7
      %v916 = vrot.slane %v860, 7
      %vm917 = vcmp.lt.s32.totalorder %v839, 1
      %v918 = vsel %vm917, %v901, %v909
      %v919 = vsel %vm917, %v902, %v910
      %v920 = vsel %vm917, %v903, %v911
      %v921 = vsel %vm917, %v904, %v912
      %v922 = vsel %vm917, %v905, %v913
      %v923 = vsel %vm917, %v906, %v914
      %v924 = vsel %vm917, %v907, %v915
      %v925 = vsel %vm917, %v908, %v916
      %v926 = vsel %vm917, %v909, %v901
      %v927 = vsel %vm917, %v910, %v902
      %v928 = vsel %vm917, %v911, %v903
      %v929 = vsel %vm917, %v912, %v904
      %v930 = vsel %vm917, %v913, %v905
      %v931 = vsel %vm917, %v914, %v906
      %v932 = vsel %vm917, %v915, %v907
      %v933 = vsel %vm917, %v916, %v908
      %v934 = vsel %vm841, 1, 0
      %v935 = vsel %vm842, 1, 0
      %vm936 = vcmp.eq.s32.totalorder %v934, 1
      %vm937 = vcmp.eq.s32.totalorder %v935, 1
      %v938 = vsel %vm936, %v926, 0.0
      %v939 = vsel %vm937, %v918, 0.0
      %v940 = vsel %vm936, %v927, 0.0
      %v941 = vsel %vm937, %v919, 0.0
      %v942 = vsel %vm936, %v928, 0.0
      %v943 = vsel %vm937, %v920, 0.0
      %v944 = vsel %vm936, %v929, 0.0
      %v945 = vsel %vm937, %v921, 0.0
      %v946 = vsel %vm936, %v930, 0.0
      %v947 = vsel %vm937, %v922, 0.0
      %v948 = vsel %vm936, %v931, 0.0
      %v949 = vsel %vm937, %v923, 0.0
      %v950 = vsel %vm936, %v932, 0.0
      %v951 = vsel %vm937, %v924, 0.0
      %v952 = vsel %vm936, %v933, 0.0
      %v953 = vsel %vm937, %v925, 0.0
      %v954 = vld [vmem:[%s5] sm:$0x1]
      %v956 = vlaneseq
      %v957 = vshrl.u32 %v956, 7
      %v958 = vsub.s32 0, %v957
      %v959 = vrot.slane %v954, %v958
      %v961 = vmul.f32 %v938, %v959
      %v962 = vmul.f32 %v939, %v959
      %v963 = vmul.f32 %v940, %v959
      %v964 = vmul.f32 %v941, %v959
      %v965 = vmul.f32 %v942, %v959
      %v966 = vmul.f32 %v943, %v959
      %v967 = vmul.f32 %v944, %v959
      %v968 = vmul.f32 %v945, %v959
      %v969 = vmul.f32 %v946, %v959
      %v970 = vmul.f32 %v947, %v959
      %v971 = vmul.f32 %v948, %v959
      %v972 = vmul.f32 %v949, %v959
      %v973 = vmul.f32 %v950, %v959
      %v974 = vmul.f32 %v951, %v959
      %v975 = vmul.f32 %v952, %v959
      %v976 = vmul.f32 %v953, %v959
      %v977 = vadd.f32 %v885, %v961
      %v978 = vadd.f32 %v886, %v962
      %v979 = vadd.f32 %v887, %v963
      %v980 = vadd.f32 %v888, %v964
      %v981 = vadd.f32 %v889, %v965
      %v982 = vadd.f32 %v890, %v966
      %v983 = vadd.f32 %v891, %v967
      %v984 = vadd.f32 %v892, %v968
      %v985 = vadd.f32 %v893, %v969
      %v986 = vadd.f32 %v894, %v970
      %v987 = vadd.f32 %v895, %v971
      %v988 = vadd.f32 %v896, %v972
      %v989 = vadd.f32 %v897, %v973
      %v990 = vadd.f32 %v898, %v974
      %v991 = vadd.f32 %v899, %v975
      %v992 = vadd.f32 %v900, %v976
      %v993 = vrot.slane %v845, 1
      %v994 = vrot.slane %v847, 1
      %v995 = vrot.slane %v849, 1
      %v996 = vrot.slane %v851, 1
      %v997 = vrot.slane %v853, 1
      %v998 = vrot.slane %v855, 1
      %v999 = vrot.slane %v857, 1
      %v1000 = vrot.slane %v859, 1
      %v1001 = vrot.slane %v846, 1
      %v1002 = vrot.slane %v848, 1
      %v1003 = vrot.slane %v850, 1
      %v1004 = vrot.slane %v852, 1
      %v1005 = vrot.slane %v854, 1
      %v1006 = vrot.slane %v856, 1
      %v1007 = vrot.slane %v858, 1
      %v1008 = vrot.slane %v860, 1
      %vm1009 = vcmp.lt.s32.totalorder %v839, 7
      %v1010 = vsel %vm1009, %v993, %v1001
      %v1011 = vsel %vm1009, %v994, %v1002
      %v1012 = vsel %vm1009, %v995, %v1003
      %v1013 = vsel %vm1009, %v996, %v1004
      %v1014 = vsel %vm1009, %v997, %v1005
      %v1015 = vsel %vm1009, %v998, %v1006
      %v1016 = vsel %vm1009, %v999, %v1007
      %v1017 = vsel %vm1009, %v1000, %v1008
      %v1018 = vsel %vm1009, %v1001, %v993
      %v1019 = vsel %vm1009, %v1002, %v994
      %v1020 = vsel %vm1009, %v1003, %v995
      %v1021 = vsel %vm1009, %v1004, %v996
      %v1022 = vsel %vm1009, %v1005, %v997
      %v1023 = vsel %vm1009, %v1006, %v998
      %v1024 = vsel %vm1009, %v1007, %v999
      %v1025 = vsel %vm1009, %v1008, %v1000
      %v1026 = vsel %vm843, 1, 0
      %v1027 = vsel %vm844, 1, 0
      %vm1028 = vcmp.eq.s32.totalorder %v1026, 1
      %vm1029 = vcmp.eq.s32.totalorder %v1027, 1
      %v1030 = vsel %vm1028, %v1010, 0.0
      %v1031 = vsel %vm1029, %v1018, 0.0
      %v1032 = vsel %vm1028, %v1011, 0.0
      %v1033 = vsel %vm1029, %v1019, 0.0
      %v1034 = vsel %vm1028, %v1012, 0.0
      %v1035 = vsel %vm1029, %v1020, 0.0
      %v1036 = vsel %vm1028, %v1013, 0.0
      %v1037 = vsel %vm1029, %v1021, 0.0
      %v1038 = vsel %vm1028, %v1014, 0.0
      %v1039 = vsel %vm1029, %v1022, 0.0
      %v1040 = vsel %vm1028, %v1015, 0.0
      %v1041 = vsel %vm1029, %v1023, 0.0
      %v1042 = vsel %vm1028, %v1016, 0.0
      %v1043 = vsel %vm1029, %v1024, 0.0
      %v1044 = vsel %vm1028, %v1017, 0.0
      %v1045 = vsel %vm1029, %v1025, 0.0
      %s1046 = scalar_lea.vmem %s5, 2
      %v1047 = vld [vmem:[%s1046] sm:$0x1]
      %v1049 = vlaneseq
      %v1050 = vshrl.u32 %v1049, 7
      %v1051 = vsub.s32 0, %v1050
      %v1052 = vrot.slane %v1047, %v1051
      %v1054 = vmul.f32 %v1030, %v1052
      %v1055 = vmul.f32 %v1031, %v1052
      %v1056 = vmul.f32 %v1032, %v1052
      %v1057 = vmul.f32 %v1033, %v1052
      %v1058 = vmul.f32 %v1034, %v1052
      %v1059 = vmul.f32 %v1035, %v1052
      %v1060 = vmul.f32 %v1036, %v1052
      %v1061 = vmul.f32 %v1037, %v1052
      %v1062 = vmul.f32 %v1038, %v1052
      %v1063 = vmul.f32 %v1039, %v1052
      %v1064 = vmul.f32 %v1040, %v1052
      %v1065 = vmul.f32 %v1041, %v1052
      %v1066 = vmul.f32 %v1042, %v1052
      %v1067 = vmul.f32 %v1043, %v1052
      %v1068 = vmul.f32 %v1044, %v1052
      %v1069 = vmul.f32 %v1045, %v1052
      %v1070 = vadd.f32 %v977, %v1054
      %v1071 = vadd.f32 %v978, %v1055
      %v1072 = vadd.f32 %v979, %v1056
      %v1073 = vadd.f32 %v980, %v1057
      %v1074 = vadd.f32 %v981, %v1058
      %v1075 = vadd.f32 %v982, %v1059
      %v1076 = vadd.f32 %v983, %v1060
      %v1077 = vadd.f32 %v984, %v1061
      %v1078 = vadd.f32 %v985, %v1062
      %v1079 = vadd.f32 %v986, %v1063
      %v1080 = vadd.f32 %v987, %v1064
      %v1081 = vadd.f32 %v988, %v1065
      %v1082 = vadd.f32 %v989, %v1066
      %v1083 = vadd.f32 %v990, %v1067
      %v1084 = vadd.f32 %v991, %v1068
      %v1085 = vadd.f32 %v992, %v1069
      %v1086 = vld [vmem:[%s815] sm:$0xff]
      %v1087 = vld [vmem:[%s815 + $0x8] sm:$0xff]
      %v1088 = vld [vmem:[%s815 + $0x10] sm:$0xff]
      %v1089 = vld [vmem:[%s815 + $0x18] sm:$0xff]
      %v1090 = vld [vmem:[%s815 + $0x20] sm:$0xff]
      %v1091 = vld [vmem:[%s815 + $0x28] sm:$0xff]
      %v1092 = vld [vmem:[%s815 + $0x30] sm:$0xff]
      %v1093 = vld [vmem:[%s815 + $0x38] sm:$0xff]
      %v1094 = vld [vmem:[%s815 + $0x40] sm:$0xff]
      %v1095 = vld [vmem:[%s815 + $0x48] sm:$0xff]
      %v1096 = vld [vmem:[%s815 + $0x50] sm:$0xff]
      %v1097 = vld [vmem:[%s815 + $0x58] sm:$0xff]
      %v1098 = vld [vmem:[%s815 + $0x60] sm:$0xff]
      %v1099 = vld [vmem:[%s815 + $0x68] sm:$0xff]
      %v1100 = vld [vmem:[%s815 + $0x70] sm:$0xff]
      %v1101 = vld [vmem:[%s815 + $0x78] sm:$0xff]
      %s1102 = scalar_lea.vmem %s5, 4
      %v1103 = vld [vmem:[%s1102] sm:$0x1]
      %v1105 = vlaneseq
      %v1106 = vshrl.u32 %v1105, 7
      %v1107 = vsub.s32 0, %v1106
      %v1108 = vrot.slane %v1103, %v1107
      %v1110 = vmul.f32 %v1086, %v1108
      %v1111 = vmul.f32 %v1087, %v1108
      %v1112 = vmul.f32 %v1088, %v1108
      %v1113 = vmul.f32 %v1089, %v1108
      %v1114 = vmul.f32 %v1090, %v1108
      %v1115 = vmul.f32 %v1091, %v1108
      %v1116 = vmul.f32 %v1092, %v1108
      %v1117 = vmul.f32 %v1093, %v1108
      %v1118 = vmul.f32 %v1094, %v1108
      %v1119 = vmul.f32 %v1095, %v1108
      %v1120 = vmul.f32 %v1096, %v1108
      %v1121 = vmul.f32 %v1097, %v1108
      %v1122 = vmul.f32 %v1098, %v1108
      %v1123 = vmul.f32 %v1099, %v1108
      %v1124 = vmul.f32 %v1100, %v1108
      %v1125 = vmul.f32 %v1101, %v1108
      %v1126 = vadd.f32 %v1070, %v1110
      %v1127 = vadd.f32 %v1071, %v1111
      %v1128 = vadd.f32 %v1072, %v1112
      %v1129 = vadd.f32 %v1073, %v1113
      %v1130 = vadd.f32 %v1074, %v1114
      %v1131 = vadd.f32 %v1075, %v1115
      %v1132 = vadd.f32 %v1076, %v1116
      %v1133 = vadd.f32 %v1077, %v1117
      %v1134 = vadd.f32 %v1078, %v1118
      %v1135 = vadd.f32 %v1079, %v1119
      %v1136 = vadd.f32 %v1080, %v1120
      %v1137 = vadd.f32 %v1081, %v1121
      %v1138 = vadd.f32 %v1082, %v1122
      %v1139 = vadd.f32 %v1083, %v1123
      %v1140 = vadd.f32 %v1084, %v1124
      %v1141 = vadd.f32 %v1085, %v1125
      %v1142 = vrot.slane %v1086, 7
      %v1143 = vrot.slane %v1088, 7
      %v1144 = vrot.slane %v1090, 7
      %v1145 = vrot.slane %v1092, 7
      %v1146 = vrot.slane %v1094, 7
      %v1147 = vrot.slane %v1096, 7
      %v1148 = vrot.slane %v1098, 7
      %v1149 = vrot.slane %v1100, 7
      %v1150 = vrot.slane %v1087, 7
      %v1151 = vrot.slane %v1089, 7
      %v1152 = vrot.slane %v1091, 7
      %v1153 = vrot.slane %v1093, 7
      %v1154 = vrot.slane %v1095, 7
      %v1155 = vrot.slane %v1097, 7
      %v1156 = vrot.slane %v1099, 7
      %v1157 = vrot.slane %v1101, 7
      %v1158 = vsel %vm917, %v1142, %v1150
      %v1159 = vsel %vm917, %v1143, %v1151
      %v1160 = vsel %vm917, %v1144, %v1152
      %v1161 = vsel %vm917, %v1145, %v1153
      %v1162 = vsel %vm917, %v1146, %v1154
      %v1163 = vsel %vm917, %v1147, %v1155
      %v1164 = vsel %vm917, %v1148, %v1156
      %v1165 = vsel %vm917, %v1149, %v1157
      %v1166 = vsel %vm917, %v1150, %v1142
      %v1167 = vsel %vm917, %v1151, %v1143
      %v1168 = vsel %vm917, %v1152, %v1144
      %v1169 = vsel %vm917, %v1153, %v1145
      %v1170 = vsel %vm917, %v1154, %v1146
      %v1171 = vsel %vm917, %v1155, %v1147
      %v1172 = vsel %vm917, %v1156, %v1148
      %v1173 = vsel %vm917, %v1157, %v1149
      %v1174 = vsel %vm936, %v1166, 0.0
      %v1175 = vsel %vm937, %v1158, 0.0
      %v1176 = vsel %vm936, %v1167, 0.0
      %v1177 = vsel %vm937, %v1159, 0.0
      %v1178 = vsel %vm936, %v1168, 0.0
      %v1179 = vsel %vm937, %v1160, 0.0
      %v1180 = vsel %vm936, %v1169, 0.0
      %v1181 = vsel %vm937, %v1161, 0.0
      %v1182 = vsel %vm936, %v1170, 0.0
      %v1183 = vsel %vm937, %v1162, 0.0
      %v1184 = vsel %vm936, %v1171, 0.0
      %v1185 = vsel %vm937, %v1163, 0.0
      %v1186 = vsel %vm936, %v1172, 0.0
      %v1187 = vsel %vm937, %v1164, 0.0
      %v1188 = vsel %vm936, %v1173, 0.0
      %v1189 = vsel %vm937, %v1165, 0.0
      %s1190 = scalar_lea.vmem %s5, 3
      %v1191 = vld [vmem:[%s1190] sm:$0x1]
      %v1193 = vlaneseq
      %v1194 = vshrl.u32 %v1193, 7
      %v1195 = vsub.s32 0, %v1194
      %v1196 = vrot.slane %v1191, %v1195
      %v1198 = vmul.f32 %v1174, %v1196
      %v1199 = vmul.f32 %v1175, %v1196
      %v1200 = vmul.f32 %v1176, %v1196
      %v1201 = vmul.f32 %v1177, %v1196
      %v1202 = vmul.f32 %v1178, %v1196
      %v1203 = vmul.f32 %v1179, %v1196
      %v1204 = vmul.f32 %v1180, %v1196
      %v1205 = vmul.f32 %v1181, %v1196
      %v1206 = vmul.f32 %v1182, %v1196
      %v1207 = vmul.f32 %v1183, %v1196
      %v1208 = vmul.f32 %v1184, %v1196
      %v1209 = vmul.f32 %v1185, %v1196
      %v1210 = vmul.f32 %v1186, %v1196
      %v1211 = vmul.f32 %v1187, %v1196
      %v1212 = vmul.f32 %v1188, %v1196
      %v1213 = vmul.f32 %v1189, %v1196
      %v1214 = vadd.f32 %v1126, %v1198
      %v1215 = vadd.f32 %v1127, %v1199
      %v1216 = vadd.f32 %v1128, %v1200
      %v1217 = vadd.f32 %v1129, %v1201
      %v1218 = vadd.f32 %v1130, %v1202
      %v1219 = vadd.f32 %v1131, %v1203
      %v1220 = vadd.f32 %v1132, %v1204
      %v1221 = vadd.f32 %v1133, %v1205
      %v1222 = vadd.f32 %v1134, %v1206
      %v1223 = vadd.f32 %v1135, %v1207
      %v1224 = vadd.f32 %v1136, %v1208
      %v1225 = vadd.f32 %v1137, %v1209
      %v1226 = vadd.f32 %v1138, %v1210
      %v1227 = vadd.f32 %v1139, %v1211
      %v1228 = vadd.f32 %v1140, %v1212
      %v1229 = vadd.f32 %v1141, %v1213
      %v1230 = vrot.slane %v1086, 1
      %v1231 = vrot.slane %v1088, 1
      %v1232 = vrot.slane %v1090, 1
      %v1233 = vrot.slane %v1092, 1
      %v1234 = vrot.slane %v1094, 1
      %v1235 = vrot.slane %v1096, 1
      %v1236 = vrot.slane %v1098, 1
      %v1237 = vrot.slane %v1100, 1
      %v1238 = vrot.slane %v1087, 1
      %v1239 = vrot.slane %v1089, 1
      %v1240 = vrot.slane %v1091, 1
      %v1241 = vrot.slane %v1093, 1
      %v1242 = vrot.slane %v1095, 1
      %v1243 = vrot.slane %v1097, 1
      %v1244 = vrot.slane %v1099, 1
      %v1245 = vrot.slane %v1101, 1
      %v1246 = vsel %vm1009, %v1230, %v1238
      %v1247 = vsel %vm1009, %v1231, %v1239
      %v1248 = vsel %vm1009, %v1232, %v1240
      %v1249 = vsel %vm1009, %v1233, %v1241
      %v1250 = vsel %vm1009, %v1234, %v1242
      %v1251 = vsel %vm1009, %v1235, %v1243
      %v1252 = vsel %vm1009, %v1236, %v1244
      %v1253 = vsel %vm1009, %v1237, %v1245
      %v1254 = vsel %vm1009, %v1238, %v1230
      %v1255 = vsel %vm1009, %v1239, %v1231
      %v1256 = vsel %vm1009, %v1240, %v1232
      %v1257 = vsel %vm1009, %v1241, %v1233
      %v1258 = vsel %vm1009, %v1242, %v1234
      %v1259 = vsel %vm1009, %v1243, %v1235
      %v1260 = vsel %vm1009, %v1244, %v1236
      %v1261 = vsel %vm1009, %v1245, %v1237
      %v1262 = vsel %vm1028, %v1246, 0.0
      %v1263 = vsel %vm1029, %v1254, 0.0
      %v1264 = vsel %vm1028, %v1247, 0.0
      %v1265 = vsel %vm1029, %v1255, 0.0
      %v1266 = vsel %vm1028, %v1248, 0.0
      %v1267 = vsel %vm1029, %v1256, 0.0
      %v1268 = vsel %vm1028, %v1249, 0.0
      %v1269 = vsel %vm1029, %v1257, 0.0
      %v1270 = vsel %vm1028, %v1250, 0.0
      %v1271 = vsel %vm1029, %v1258, 0.0
      %v1272 = vsel %vm1028, %v1251, 0.0
      %v1273 = vsel %vm1029, %v1259, 0.0
      %v1274 = vsel %vm1028, %v1252, 0.0
      %v1275 = vsel %vm1029, %v1260, 0.0
      %v1276 = vsel %vm1028, %v1253, 0.0
      %v1277 = vsel %vm1029, %v1261, 0.0
      %s1278 = scalar_lea.vmem %s5, 5
      %v1279 = vld [vmem:[%s1278] sm:$0x1]
      %v1281 = vlaneseq
      %v1282 = vshrl.u32 %v1281, 7
      %v1283 = vsub.s32 0, %v1282
      %v1284 = vrot.slane %v1279, %v1283
      %v1286 = vmul.f32 %v1262, %v1284
      %v1287 = vmul.f32 %v1263, %v1284
      %v1288 = vmul.f32 %v1264, %v1284
      %v1289 = vmul.f32 %v1265, %v1284
      %v1290 = vmul.f32 %v1266, %v1284
      %v1291 = vmul.f32 %v1267, %v1284
      %v1292 = vmul.f32 %v1268, %v1284
      %v1293 = vmul.f32 %v1269, %v1284
      %v1294 = vmul.f32 %v1270, %v1284
      %v1295 = vmul.f32 %v1271, %v1284
      %v1296 = vmul.f32 %v1272, %v1284
      %v1297 = vmul.f32 %v1273, %v1284
      %v1298 = vmul.f32 %v1274, %v1284
      %v1299 = vmul.f32 %v1275, %v1284
      %v1300 = vmul.f32 %v1276, %v1284
      %v1301 = vmul.f32 %v1277, %v1284
      %v1302 = vadd.f32 %v1214, %v1286
      %v1303 = vadd.f32 %v1215, %v1287
      %v1304 = vadd.f32 %v1216, %v1288
      %v1305 = vadd.f32 %v1217, %v1289
      %v1306 = vadd.f32 %v1218, %v1290
      %v1307 = vadd.f32 %v1219, %v1291
      %v1308 = vadd.f32 %v1220, %v1292
      %v1309 = vadd.f32 %v1221, %v1293
      %v1310 = vadd.f32 %v1222, %v1294
      %v1311 = vadd.f32 %v1223, %v1295
      %v1312 = vadd.f32 %v1224, %v1296
      %v1313 = vadd.f32 %v1225, %v1297
      %v1314 = vadd.f32 %v1226, %v1298
      %v1315 = vadd.f32 %v1227, %v1299
      %v1316 = vadd.f32 %v1228, %v1300
      %v1317 = vadd.f32 %v1229, %v1301
      %s1318 = scalar_lea.vmem [#allocation2], 32
      %v1319 = vld [vmem:[%s1318] sm:$0xff]
      %v1320 = vld [vmem:[%s1318 + $0x8] sm:$0xff]
      %v1321 = vld [vmem:[%s1318 + $0x10] sm:$0xff]
      %v1322 = vld [vmem:[%s1318 + $0x18] sm:$0xff]
      %v1323 = vld [vmem:[%s1318 + $0x20] sm:$0xff]
      %v1324 = vld [vmem:[%s1318 + $0x28] sm:$0xff]
      %v1325 = vld [vmem:[%s1318 + $0x30] sm:$0xff]
      %v1326 = vld [vmem:[%s1318 + $0x38] sm:$0xff]
      %v1327 = vld [vmem:[%s1318 + $0x40] sm:$0xff]
      %v1328 = vld [vmem:[%s1318 + $0x48] sm:$0xff]
      %v1329 = vld [vmem:[%s1318 + $0x50] sm:$0xff]
      %v1330 = vld [vmem:[%s1318 + $0x58] sm:$0xff]
      %v1331 = vld [vmem:[%s1318 + $0x60] sm:$0xff]
      %v1332 = vld [vmem:[%s1318 + $0x68] sm:$0xff]
      %v1333 = vld [vmem:[%s1318 + $0x70] sm:$0xff]
      %v1334 = vld [vmem:[%s1318 + $0x78] sm:$0xff]
      %s1335 = scalar_lea.vmem %s5, 7
      %v1336 = vld [vmem:[%s1335] sm:$0x1]
      %v1338 = vlaneseq
      %v1339 = vshrl.u32 %v1338, 7
      %v1340 = vsub.s32 0, %v1339
      %v1341 = vrot.slane %v1336, %v1340
      %v1343 = vmul.f32 %v1319, %v1341
      %v1344 = vmul.f32 %v1320, %v1341
      %v1345 = vmul.f32 %v1321, %v1341
      %v1346 = vmul.f32 %v1322, %v1341
      %v1347 = vmul.f32 %v1323, %v1341
      %v1348 = vmul.f32 %v1324, %v1341
      %v1349 = vmul.f32 %v1325, %v1341
      %v1350 = vmul.f32 %v1326, %v1341
      %v1351 = vmul.f32 %v1327, %v1341
      %v1352 = vmul.f32 %v1328, %v1341
      %v1353 = vmul.f32 %v1329, %v1341
      %v1354 = vmul.f32 %v1330, %v1341
      %v1355 = vmul.f32 %v1331, %v1341
      %v1356 = vmul.f32 %v1332, %v1341
      %v1357 = vmul.f32 %v1333, %v1341
      %v1358 = vmul.f32 %v1334, %v1341
      %v1359 = vadd.f32 %v1302, %v1343
      %v1360 = vadd.f32 %v1303, %v1344
      %v1361 = vadd.f32 %v1304, %v1345
      %v1362 = vadd.f32 %v1305, %v1346
      %v1363 = vadd.f32 %v1306, %v1347
      %v1364 = vadd.f32 %v1307, %v1348
      %v1365 = vadd.f32 %v1308, %v1349
      %v1366 = vadd.f32 %v1309, %v1350
      %v1367 = vadd.f32 %v1310, %v1351
      %v1368 = vadd.f32 %v1311, %v1352
      %v1369 = vadd.f32 %v1312, %v1353
      %v1370 = vadd.f32 %v1313, %v1354
      %v1371 = vadd.f32 %v1314, %v1355
      %v1372 = vadd.f32 %v1315, %v1356
      %v1373 = vadd.f32 %v1316, %v1357
      %v1374 = vadd.f32 %v1317, %v1358
      %v1375 = vrot.slane %v1319, 7
      %v1376 = vrot.slane %v1321, 7
      %v1377 = vrot.slane %v1323, 7
      %v1378 = vrot.slane %v1325, 7
      %v1379 = vrot.slane %v1327, 7
      %v1380 = vrot.slane %v1329, 7
      %v1381 = vrot.slane %v1331, 7
      %v1382 = vrot.slane %v1333, 7
      %v1383 = vrot.slane %v1320, 7
      %v1384 = vrot.slane %v1322, 7
      %v1385 = vrot.slane %v1324, 7
      %v1386 = vrot.slane %v1326, 7
      %v1387 = vrot.slane %v1328, 7
      %v1388 = vrot.slane %v1330, 7
      %v1389 = vrot.slane %v1332, 7
      %v1390 = vrot.slane %v1334, 7
      %v1391 = vsel %vm917, %v1375, %v1383
      %v1392 = vsel %vm917, %v1376, %v1384
      %v1393 = vsel %vm917, %v1377, %v1385
      %v1394 = vsel %vm917, %v1378, %v1386
      %v1395 = vsel %vm917, %v1379, %v1387
      %v1396 = vsel %vm917, %v1380, %v1388
      %v1397 = vsel %vm917, %v1381, %v1389
      %v1398 = vsel %vm917, %v1382, %v1390
      %v1399 = vsel %vm917, %v1383, %v1375
      %v1400 = vsel %vm917, %v1384, %v1376
      %v1401 = vsel %vm917, %v1385, %v1377
      %v1402 = vsel %vm917, %v1386, %v1378
      %v1403 = vsel %vm917, %v1387, %v1379
      %v1404 = vsel %vm917, %v1388, %v1380
      %v1405 = vsel %vm917, %v1389, %v1381
      %v1406 = vsel %vm917, %v1390, %v1382
      %v1407 = vsel %vm936, %v1399, 0.0
      %v1408 = vsel %vm937, %v1391, 0.0
      %v1409 = vsel %vm936, %v1400, 0.0
      %v1410 = vsel %vm937, %v1392, 0.0
      %v1411 = vsel %vm936, %v1401, 0.0
      %v1412 = vsel %vm937, %v1393, 0.0
      %v1413 = vsel %vm936, %v1402, 0.0
      %v1414 = vsel %vm937, %v1394, 0.0
      %v1415 = vsel %vm936, %v1403, 0.0
      %v1416 = vsel %vm937, %v1395, 0.0
      %v1417 = vsel %vm936, %v1404, 0.0
      %v1418 = vsel %vm937, %v1396, 0.0
      %v1419 = vsel %vm936, %v1405, 0.0
      %v1420 = vsel %vm937, %v1397, 0.0
      %v1421 = vsel %vm936, %v1406, 0.0
      %v1422 = vsel %vm937, %v1398, 0.0
      %s1423 = scalar_lea.vmem %s5, 6
      %v1424 = vld [vmem:[%s1423] sm:$0x1]
      %v1426 = vlaneseq
      %v1427 = vshrl.u32 %v1426, 7
      %v1428 = vsub.s32 0, %v1427
      %v1429 = vrot.slane %v1424, %v1428
      %v1431 = vmul.f32 %v1407, %v1429
      %v1432 = vmul.f32 %v1408, %v1429
      %v1433 = vmul.f32 %v1409, %v1429
      %v1434 = vmul.f32 %v1410, %v1429
      %v1435 = vmul.f32 %v1411, %v1429
      %v1436 = vmul.f32 %v1412, %v1429
      %v1437 = vmul.f32 %v1413, %v1429
      %v1438 = vmul.f32 %v1414, %v1429
      %v1439 = vmul.f32 %v1415, %v1429
      %v1440 = vmul.f32 %v1416, %v1429
      %v1441 = vmul.f32 %v1417, %v1429
      %v1442 = vmul.f32 %v1418, %v1429
      %v1443 = vmul.f32 %v1419, %v1429
      %v1444 = vmul.f32 %v1420, %v1429
      %v1445 = vmul.f32 %v1421, %v1429
      %v1446 = vmul.f32 %v1422, %v1429
      %v1447 = vadd.f32 %v1359, %v1431
      %v1448 = vadd.f32 %v1360, %v1432
      %v1449 = vadd.f32 %v1361, %v1433
      %v1450 = vadd.f32 %v1362, %v1434
      %v1451 = vadd.f32 %v1363, %v1435
      %v1452 = vadd.f32 %v1364, %v1436
      %v1453 = vadd.f32 %v1365, %v1437
      %v1454 = vadd.f32 %v1366, %v1438
      %v1455 = vadd.f32 %v1367, %v1439
      %v1456 = vadd.f32 %v1368, %v1440
      %v1457 = vadd.f32 %v1369, %v1441
      %v1458 = vadd.f32 %v1370, %v1442
      %v1459 = vadd.f32 %v1371, %v1443
      %v1460 = vadd.f32 %v1372, %v1444
      %v1461 = vadd.f32 %v1373, %v1445
      %v1462 = vadd.f32 %v1374, %v1446
      %v1463 = vrot.slane %v1319, 1
      %v1464 = vrot.slane %v1321, 1
      %v1465 = vrot.slane %v1323, 1
      %v1466 = vrot.slane %v1325, 1
      %v1467 = vrot.slane %v1327, 1
      %v1468 = vrot.slane %v1329, 1
      %v1469 = vrot.slane %v1331, 1
      %v1470 = vrot.slane %v1333, 1
      %v1471 = vrot.slane %v1320, 1
      %v1472 = vrot.slane %v1322, 1
      %v1473 = vrot.slane %v1324, 1
      %v1474 = vrot.slane %v1326, 1
      %v1475 = vrot.slane %v1328, 1
      %v1476 = vrot.slane %v1330, 1
      %v1477 = vrot.slane %v1332, 1
      %v1478 = vrot.slane %v1334, 1
      %v1479 = vsel %vm1009, %v1463, %v1471
      %v1480 = vsel %vm1009, %v1464, %v1472
      %v1481 = vsel %vm1009, %v1465, %v1473
      %v1482 = vsel %vm1009, %v1466, %v1474
      %v1483 = vsel %vm1009, %v1467, %v1475
      %v1484 = vsel %vm1009, %v1468, %v1476
      %v1485 = vsel %vm1009, %v1469, %v1477
      %v1486 = vsel %vm1009, %v1470, %v1478
      %v1487 = vsel %vm1009, %v1471, %v1463
      %v1488 = vsel %vm1009, %v1472, %v1464
      %v1489 = vsel %vm1009, %v1473, %v1465
      %v1490 = vsel %vm1009, %v1474, %v1466
      %v1491 = vsel %vm1009, %v1475, %v1467
      %v1492 = vsel %vm1009, %v1476, %v1468
      %v1493 = vsel %vm1009, %v1477, %v1469
      %v1494 = vsel %vm1009, %v1478, %v1470
      %v1495 = vsel %vm1028, %v1479, 0.0
      %v1496 = vsel %vm1029, %v1487, 0.0
      %v1497 = vsel %vm1028, %v1480, 0.0
      %v1498 = vsel %vm1029, %v1488, 0.0
      %v1499 = vsel %vm1028, %v1481, 0.0
      %v1500 = vsel %vm1029, %v1489, 0.0
      %v1501 = vsel %vm1028, %v1482, 0.0
      %v1502 = vsel %vm1029, %v1490, 0.0
      %v1503 = vsel %vm1028, %v1483, 0.0
      %v1504 = vsel %vm1029, %v1491, 0.0
      %v1505 = vsel %vm1028, %v1484, 0.0
      %v1506 = vsel %vm1029, %v1492, 0.0
      %v1507 = vsel %vm1028, %v1485, 0.0
      %v1508 = vsel %vm1029, %v1493, 0.0
      %v1509 = vsel %vm1028, %v1486, 0.0
      %v1510 = vsel %vm1029, %v1494, 0.0
      %s1511 = scalar_lea.vmem %s5, 8
      %v1512 = vld [vmem:[%s1511] sm:$0x1]
      %v1514 = vlaneseq
      %v1515 = vshrl.u32 %v1514, 7
      %v1516 = vsub.s32 0, %v1515
      %v1517 = vrot.slane %v1512, %v1516
      %v1519 = vmul.f32 %v1495, %v1517
      %v1520 = vmul.f32 %v1496, %v1517
      %v1521 = vmul.f32 %v1497, %v1517
      %v1522 = vmul.f32 %v1498, %v1517
      %v1523 = vmul.f32 %v1499, %v1517
      %v1524 = vmul.f32 %v1500, %v1517
      %v1525 = vmul.f32 %v1501, %v1517
      %v1526 = vmul.f32 %v1502, %v1517
      %v1527 = vmul.f32 %v1503, %v1517
      %v1528 = vmul.f32 %v1504, %v1517
      %v1529 = vmul.f32 %v1505, %v1517
      %v1530 = vmul.f32 %v1506, %v1517
      %v1531 = vmul.f32 %v1507, %v1517
      %v1532 = vmul.f32 %v1508, %v1517
      %v1533 = vmul.f32 %v1509, %v1517
      %v1534 = vmul.f32 %v1510, %v1517
      %v1535 = vadd.f32 %v1447, %v1519
      %v1536 = vadd.f32 %v1448, %v1520
      %v1537 = vadd.f32 %v1449, %v1521
      %v1538 = vadd.f32 %v1450, %v1522
      %v1539 = vadd.f32 %v1451, %v1523
      %v1540 = vadd.f32 %v1452, %v1524
      %v1541 = vadd.f32 %v1453, %v1525
      %v1542 = vadd.f32 %v1454, %v1526
      %v1543 = vadd.f32 %v1455, %v1527
      %v1544 = vadd.f32 %v1456, %v1528
      %v1545 = vadd.f32 %v1457, %v1529
      %v1546 = vadd.f32 %v1458, %v1530
      %v1547 = vadd.f32 %v1459, %v1531
      %v1548 = vadd.f32 %v1460, %v1532
      %v1549 = vadd.f32 %v1461, %v1533
      %v1550 = vadd.f32 %v1462, %v1534
      %v1551 = vld [vmem:[%s6] sm:$0x1]
      %v1553 = vlaneseq
      %v1554 = vshrl.u32 %v1553, 7
      %v1555 = vsub.s32 0, %v1554
      %v1556 = vrot.slane %v1551, %v1555
      %v1558 = vadd.f32 %v1535, %v1556
      %v1559 = vadd.f32 %v1536, %v1556
      %v1560 = vadd.f32 %v1537, %v1556
      %v1561 = vadd.f32 %v1538, %v1556
      %v1562 = vadd.f32 %v1539, %v1556
      %v1563 = vadd.f32 %v1540, %v1556
      %v1564 = vadd.f32 %v1541, %v1556
      %v1565 = vadd.f32 %v1542, %v1556
      %v1566 = vadd.f32 %v1543, %v1556
      %v1567 = vadd.f32 %v1544, %v1556
      %v1568 = vadd.f32 %v1545, %v1556
      %v1569 = vadd.f32 %v1546, %v1556
      %v1570 = vadd.f32 %v1547, %v1556
      %v1571 = vadd.f32 %v1548, %v1556
      %v1572 = vadd.f32 %v1549, %v1556
      %v1573 = vadd.f32 %v1550, %v1556
      %v1574 = vmax.f32 %v1558, 0.0
      %v1575 = vmax.f32 %v1559, 0.0
      %v1576 = vmax.f32 %v1560, 0.0
      %v1577 = vmax.f32 %v1561, 0.0
      %v1578 = vmax.f32 %v1562, 0.0
      %v1579 = vmax.f32 %v1563, 0.0
      %v1580 = vmax.f32 %v1564, 0.0
      %v1581 = vmax.f32 %v1565, 0.0
      %v1582 = vmax.f32 %v1566, 0.0
      %v1583 = vmax.f32 %v1567, 0.0
      %v1584 = vmax.f32 %v1568, 0.0
      %v1585 = vmax.f32 %v1569, 0.0
      %v1586 = vmax.f32 %v1570, 0.0
      %v1587 = vmax.f32 %v1571, 0.0
      %v1588 = vmax.f32 %v1572, 0.0
      %v1589 = vmax.f32 %v1573, 0.0
      %v1590 = vmin.f32 %v1574, 6.0
      %v1591 = vmin.f32 %v1575, 6.0
      %v1592 = vmin.f32 %v1576, 6.0
      %v1593 = vmin.f32 %v1577, 6.0
      %v1594 = vmin.f32 %v1578, 6.0
      %v1595 = vmin.f32 %v1579, 6.0
      %v1596 = vmin.f32 %v1580, 6.0
      %v1597 = vmin.f32 %v1581, 6.0
      %v1598 = vmin.f32 %v1582, 6.0
      %v1599 = vmin.f32 %v1583, 6.0
      %v1600 = vmin.f32 %v1584, 6.0
      %v1601 = vmin.f32 %v1585, 6.0
      %v1602 = vmin.f32 %v1586, 6.0
      %v1603 = vmin.f32 %v1587, 6.0
      %v1604 = vmin.f32 %v1588, 6.0
      %v1605 = vmin.f32 %v1589, 6.0
      %v1606 = vpack.c.bf16 %v1591, %v1590
      %v1607 = vpack.c.bf16 %v1593, %v1592
      %v1608 = vpack.c.bf16 %v1595, %v1594
      %v1609 = vpack.c.bf16 %v1597, %v1596
      %v1610 = vpack.c.bf16 %v1599, %v1598
      %v1611 = vpack.c.bf16 %v1601, %v1600
      %v1612 = vpack.c.bf16 %v1603, %v1602
      %v1613 = vpack.c.bf16 %v1605, %v1604
      %v1614 = vld [vmem:[%s7] sm:$0xf]
      %v1615 = vld [vmem:[%s7 + $0x4] sm:$0xf]
      %v1616 = vld [vmem:[%s7 + $0x8] sm:$0xf]
      %v1617 = vld [vmem:[%s7 + $0xc] sm:$0xf]
      %v1618 = vld [vmem:[%s7 + $0x10] sm:$0xf]
      %v1619 = vld [vmem:[%s7 + $0x14] sm:$0xf]
      %v1620 = vld [vmem:[%s7 + $0x18] sm:$0xf]
      %v1621 = vld [vmem:[%s7 + $0x1c] sm:$0xf]
      %v1622 = vld [vmem:[%s7 + $0x20] sm:$0xf]
      %v1623 = vld [vmem:[%s7 + $0x24] sm:$0xf]
      %v1624 = vld [vmem:[%s7 + $0x28] sm:$0xf]
      %v1625 = vld [vmem:[%s7 + $0x2c] sm:$0xf]
      %v1626 = vld [vmem:[%s7 + $0x30] sm:$0xf]
      %v1627 = vld [vmem:[%s7 + $0x34] sm:$0xf]
      %v1628 = vld [vmem:[%s7 + $0x38] sm:$0xf]
      %v1629 = vld [vmem:[%s7 + $0x3c] sm:$0xf]
      %v1630 = vld [vmem:[%s8] sm:$0x1]
      %v1632 = vlaneseq
      %v1633 = vshrl.u32 %v1632, 7
      %v1634 = vsub.s32 0, %v1633
      %v1635 = vrot.slane %v1630, %v1634
      %v1653 = vunpack.c.l.b16 %v1614
      %v1654 = vunpack.c.l.b16 %v1615
      %v1655 = vunpack.c.l.b16 %v1616
      %v1656 = vunpack.c.l.b16 %v1617
      %v1657 = vunpack.c.l.b16 %v1618
      %v1658 = vunpack.c.l.b16 %v1619
      %v1659 = vunpack.c.l.b16 %v1620
      %v1660 = vunpack.c.l.b16 %v1621
      %v1661 = vunpack.c.l.b16 %v1622
      %v1662 = vunpack.c.l.b16 %v1623
      %v1663 = vunpack.c.l.b16 %v1624
      %v1664 = vunpack.c.l.b16 %v1625
      %v1665 = vunpack.c.l.b16 %v1626
      %v1666 = vunpack.c.l.b16 %v1627
      %v1667 = vunpack.c.l.b16 %v1628
      %v1668 = vunpack.c.l.b16 %v1629
      %v1669 = vpack.c.b16 %v1654, %v1653
      %v1670 = vpack.c.b16 %v1656, %v1655
      %v1671 = vpack.c.b16 %v1658, %v1657
      %v1672 = vpack.c.b16 %v1660, %v1659
      %v1673 = vpack.c.b16 %v1662, %v1661
      %v1674 = vpack.c.b16 %v1664, %v1663
      %v1675 = vpack.c.b16 %v1666, %v1665
      %v1676 = vpack.c.b16 %v1668, %v1667
      %1685 = vmatprep.subr.bf16.mxu0 0
      %1686 = vmatpush1.bf16.msra.mxu0 %v1676
      %1687 = vmatprep.subr.bf16.mxu0 0
      %1688 = vmatpush1.bf16.msra.mxu0 %v1675
      %1689 = vmatprep.subr.bf16.mxu0 0
      %1690 = vmatpush1.bf16.msra.mxu0 %v1674
      %1691 = vmatprep.subr.bf16.mxu0 0
      %1692 = vmatpush1.bf16.msra.mxu0 %v1673
      %1693 = vmatprep.subr.bf16.mxu0 0
      %1694 = vmatpush1.bf16.msra.mxu0 %v1672
      %1695 = vmatprep.subr.bf16.mxu0 0
      %1696 = vmatpush1.bf16.msra.mxu0 %v1671
      %1697 = vmatprep.subr.bf16.mxu0 0
      %1698 = vmatpush1.bf16.msra.mxu0 %v1670
      %1699 = vmatprep.subr.bf16.mxu0 0
      %1700 = vmatpush1.bf16.msra.mxu0 %v1669
      %1701 = vmatprep.subr.bf16.mxu0 0
      %1702 = vmatpush2.bf16.msra.mxu0 0
      %1703 = vmatprep.subr.bf16.mxu0 0
      %1704 = vmatpush2.bf16.msra.mxu0 0
      %1705 = vmatprep.subr.bf16.mxu0 0
      %1706 = vmatpush2.bf16.msra.mxu0 0
      %1707 = vmatprep.subr.bf16.mxu0 0
      %1708 = vmatpush2.bf16.msra.mxu0 0
      %1709 = vmatprep.subr.bf16.mxu0 0
      %1710 = vmatpush2.bf16.msra.mxu0 0
      %1711 = vmatprep.subr.bf16.mxu0 0
      %1712 = vmatpush2.bf16.msra.mxu0 0
      %1713 = vmatprep.subr.bf16.mxu0 0
      %1714 = vmatpush2.bf16.msra.mxu0 0
      %1715 = vmatprep.subr.bf16.mxu0 0
      %1716 = vmatpush2.bf16.msra.mxu0 0
      %1717 = vmatprep.mubr.bf16.mxu0 0
      %1718 = vmatmul.mubr.bf16.gmra.mxu0 %v1606
      %v1719 = vpop.f32.mrf.mxu0
      %v1720 = vadd.f32 %v1635, %v1719
      %v1721 = vpop.f32.mrf.mxu0
      %v1722 = vpop.f32.mrf.mxu0
      %v1723 = vadd.f32 %v1635, %v1722
      %v1724 = vpop.f32.mrf.mxu0
      %1725 = vmatprep.mubr.bf16.mxu0 0
      %1726 = vmatmul.mubr.bf16.gmra.mxu0 %v1607
      %v1727 = vpop.f32.mrf.mxu0
      %v1728 = vadd.f32 %v1635, %v1727
      %v1729 = vpop.f32.mrf.mxu0
      %v1730 = vpop.f32.mrf.mxu0
      %v1731 = vadd.f32 %v1635, %v1730
      %v1732 = vpop.f32.mrf.mxu0
      %1733 = vmatprep.mubr.bf16.mxu0 0
      %1734 = vmatmul.mubr.bf16.gmra.mxu0 %v1608
      %v1735 = vpop.f32.mrf.mxu0
      %v1736 = vadd.f32 %v1635, %v1735
      %v1737 = vpop.f32.mrf.mxu0
      %v1738 = vpop.f32.mrf.mxu0
      %v1739 = vadd.f32 %v1635, %v1738
      %v1740 = vpop.f32.mrf.mxu0
      %1741 = vmatprep.mubr.bf16.mxu0 0
      %1742 = vmatmul.mubr.bf16.gmra.mxu0 %v1609
      %v1743 = vpop.f32.mrf.mxu0
      %v1744 = vadd.f32 %v1635, %v1743
      %v1745 = vpop.f32.mrf.mxu0
      %v1746 = vpop.f32.mrf.mxu0
      %v1747 = vadd.f32 %v1635, %v1746
      %v1748 = vpop.f32.mrf.mxu0
      %1749 = vmatprep.mubr.bf16.mxu0 0
      %1750 = vmatmul.mubr.bf16.gmra.mxu0 %v1610
      %v1751 = vpop.f32.mrf.mxu0
      %v1752 = vadd.f32 %v1635, %v1751
      %v1753 = vpop.f32.mrf.mxu0
      %v1754 = vpop.f32.mrf.mxu0
      %v1755 = vadd.f32 %v1635, %v1754
      %v1756 = vpop.f32.mrf.mxu0
      %1757 = vmatprep.mubr.bf16.mxu0 0
      %1758 = vmatmul.mubr.bf16.gmra.mxu0 %v1611
      %v1759 = vpop.f32.mrf.mxu0
      %v1760 = vadd.f32 %v1635, %v1759
      %v1761 = vpop.f32.mrf.mxu0
      %v1762 = vpop.f32.mrf.mxu0
      %v1763 = vadd.f32 %v1635, %v1762
      %v1764 = vpop.f32.mrf.mxu0
      %1765 = vmatprep.mubr.bf16.mxu0 0
      %1766 = vmatmul.mubr.bf16.gmra.mxu0 %v1612
      %v1767 = vpop.f32.mrf.mxu0
      %v1768 = vadd.f32 %v1635, %v1767
      %v1769 = vpop.f32.mrf.mxu0
      %v1770 = vpop.f32.mrf.mxu0
      %v1771 = vadd.f32 %v1635, %v1770
      %v1772 = vpop.f32.mrf.mxu0
      %1773 = vmatprep.mubr.bf16.mxu0 0
      %1774 = vmatmul.mubr.bf16.gmra.mxu0 %v1613
      %v1775 = vpop.f32.mrf.mxu0
      %v1776 = vadd.f32 %v1635, %v1775
      %v1777 = vpop.f32.mrf.mxu0
      %v1778 = vpop.f32.mrf.mxu0
      %v1779 = vadd.f32 %v1635, %v1778
      %v1780 = vpop.f32.mrf.mxu0
      %1781 = vdwg.mxu0
      %v1782 = vld [vmem:[%s454] sm:$0xf]
      %v1783 = vld [vmem:[%s454 + $0x4] sm:$0xf]
      %v1784 = vld [vmem:[%s454 + $0x8] sm:$0xf]
      %v1785 = vld [vmem:[%s454 + $0xc] sm:$0xf]
      %v1786 = vld [vmem:[%s454 + $0x10] sm:$0xf]
      %v1787 = vld [vmem:[%s454 + $0x14] sm:$0xf]
      %v1788 = vld [vmem:[%s454 + $0x18] sm:$0xf]
      %v1789 = vld [vmem:[%s454 + $0x1c] sm:$0xf]
      %v1790 = vld [vmem:[%s454 + $0x20] sm:$0xf]
      %v1791 = vld [vmem:[%s454 + $0x24] sm:$0xf]
      %v1792 = vld [vmem:[%s454 + $0x28] sm:$0xf]
      %v1793 = vld [vmem:[%s454 + $0x2c] sm:$0xf]
      %v1794 = vld [vmem:[%s454 + $0x30] sm:$0xf]
      %v1795 = vld [vmem:[%s454 + $0x34] sm:$0xf]
      %v1796 = vld [vmem:[%s454 + $0x38] sm:$0xf]
      %v1797 = vld [vmem:[%s454 + $0x3c] sm:$0xf]
      %v1798 = vunpack.c.l.bf16 %v1782
      %v1799 = vunpack.c.l.bf16 %v1783
      %v1800 = vunpack.c.l.bf16 %v1784
      %v1801 = vunpack.c.l.bf16 %v1785
      %v1802 = vunpack.c.l.bf16 %v1786
      %v1803 = vunpack.c.l.bf16 %v1787
      %v1804 = vunpack.c.l.bf16 %v1788
      %v1805 = vunpack.c.l.bf16 %v1789
      %v1806 = vunpack.c.l.bf16 %v1790
      %v1807 = vunpack.c.l.bf16 %v1791
      %v1808 = vunpack.c.l.bf16 %v1792
      %v1809 = vunpack.c.l.bf16 %v1793
      %v1810 = vunpack.c.l.bf16 %v1794
      %v1811 = vunpack.c.l.bf16 %v1795
      %v1812 = vunpack.c.l.bf16 %v1796
      %v1813 = vunpack.c.l.bf16 %v1797
      %v1814 = vadd.f32 %v1720, %v1798
      %v1815 = vadd.f32 %v1723, %v1799
      %v1816 = vadd.f32 %v1728, %v1800
      %v1817 = vadd.f32 %v1731, %v1801
      %v1818 = vadd.f32 %v1736, %v1802
      %v1819 = vadd.f32 %v1739, %v1803
      %v1820 = vadd.f32 %v1744, %v1804
      %v1821 = vadd.f32 %v1747, %v1805
      %v1822 = vadd.f32 %v1752, %v1806
      %v1823 = vadd.f32 %v1755, %v1807
      %v1824 = vadd.f32 %v1760, %v1808
      %v1825 = vadd.f32 %v1763, %v1809
      %v1826 = vadd.f32 %v1768, %v1810
      %v1827 = vadd.f32 %v1771, %v1811
      %v1828 = vadd.f32 %v1776, %v1812
      %v1829 = vadd.f32 %v1779, %v1813
      %v1830 = vpack.c.bf16 %v1815, %v1814
      %v1831 = vpack.c.bf16 %v1817, %v1816
      %v1832 = vpack.c.bf16 %v1819, %v1818
      %v1833 = vpack.c.bf16 %v1821, %v1820
      %v1834 = vpack.c.bf16 %v1823, %v1822
      %v1835 = vpack.c.bf16 %v1825, %v1824
      %v1836 = vpack.c.bf16 %v1827, %v1826
      %v1837 = vpack.c.bf16 %v1829, %v1828
      %v1846 = vunpack.c.l.b16 %v1830
      %v1847 = vunpack.c.h.b16 %v1830
      %v1848 = vunpack.c.l.b16 %v1831
      %v1849 = vunpack.c.h.b16 %v1831
      %v1850 = vunpack.c.l.b16 %v1832
      %v1851 = vunpack.c.h.b16 %v1832
      %v1852 = vunpack.c.l.b16 %v1833
      %v1853 = vunpack.c.h.b16 %v1833
      %v1854 = vunpack.c.l.b16 %v1834
      %v1855 = vunpack.c.h.b16 %v1834
      %v1856 = vunpack.c.l.b16 %v1835
      %v1857 = vunpack.c.h.b16 %v1835
      %v1858 = vunpack.c.l.b16 %v1836
      %v1859 = vunpack.c.h.b16 %v1836
      %v1860 = vunpack.c.l.b16 %v1837
      %v1861 = vunpack.c.h.b16 %v1837
      %v1862 = vpack.c.b16 %v1846, %v1846
      %v1863 = vpack.c.b16 %v1847, %v1847
      %v1864 = vpack.c.b16 %v1848, %v1848
      %v1865 = vpack.c.b16 %v1849, %v1849
      %v1866 = vpack.c.b16 %v1850, %v1850
      %v1867 = vpack.c.b16 %v1851, %v1851
      %v1868 = vpack.c.b16 %v1852, %v1852
      %v1869 = vpack.c.b16 %v1853, %v1853
      %v1870 = vpack.c.b16 %v1854, %v1854
      %v1871 = vpack.c.b16 %v1855, %v1855
      %v1872 = vpack.c.b16 %v1856, %v1856
      %v1873 = vpack.c.b16 %v1857, %v1857
      %v1874 = vpack.c.b16 %v1858, %v1858
      %v1875 = vpack.c.b16 %v1859, %v1859
      %v1876 = vpack.c.b16 %v1860, %v1860
      %v1877 = vpack.c.b16 %v1861, %v1861
      %1894 = vst [vmem:[%s499] sm:$0xf] %v1862
      %1895 = vst [vmem:[%s499 + $0x4] sm:$0xf] %v1863
      %1896 = vst [vmem:[%s499 + $0x8] sm:$0xf] %v1864
      %1897 = vst [vmem:[%s499 + $0xc] sm:$0xf] %v1865
      %1898 = vst [vmem:[%s499 + $0x10] sm:$0xf] %v1866
      %1899 = vst [vmem:[%s499 + $0x14] sm:$0xf] %v1867
      %1900 = vst [vmem:[%s499 + $0x18] sm:$0xf] %v1868
      %1901 = vst [vmem:[%s499 + $0x1c] sm:$0xf] %v1869
      %1902 = vst [vmem:[%s499 + $0x20] sm:$0xf] %v1870
      %1903 = vst [vmem:[%s499 + $0x24] sm:$0xf] %v1871
      %1904 = vst [vmem:[%s499 + $0x28] sm:$0xf] %v1872
      %1905 = vst [vmem:[%s499 + $0x2c] sm:$0xf] %v1873
      %1906 = vst [vmem:[%s499 + $0x30] sm:$0xf] %v1874
      %1907 = vst [vmem:[%s499 + $0x34] sm:$0xf] %v1875
      %1908 = vst [vmem:[%s499 + $0x38] sm:$0xf] %v1876
      %1909 = vst [vmem:[%s499 + $0x3c] sm:$0xf] %v1877
      %s1910 = smul.u32 8, %s25
      %p1911 = scmp.lt.s32.totalorder %s24, 1
      %s1912 = scalar_select %p1911, %s24, 1
      %p1913 = scmp.lt.s32.totalorder %s1910, 15
      %s1914 = scalar_select %p1913, %s1910, 15
      %s1915 = smul.addr %s1914, 2
      %s1916 = smul.addr %s1912, 32
      %s1917 = sadd.s32 %s1915, %s1916
      %s1918 = smul.addr %s1917, 4
      %s1919 = scalar_lea.vmem %s9, %s1918
      // Predicated region
      $region57: #{inverted_residual.1} parent=55 // pred_check
        %p1920 = pneg %p278
      $region58: #{inverted_residual.1} parent=55 // pred_check_branch
        %1922 = sbr.rel (%p1920) target = $region60
      $region59: #{inverted_residual.1} parent=55 // pred_region
        %s1923 = smul.u32 8, %s25
      $region60: #{inverted_residual.1} parent=55 // pred_fallthru
        _
    $region56: #{inverted_residual.1} parent=5 // pred_fallthru
      _
    %p1924 = scmp.le.s32.totalorder 2, %s15
    // Predicated region
    $region61: #{inverted_residual.1} parent=5 // pred_check
      %p1925 = pneg %p1924
    $region62: #{inverted_residual.1} parent=5 // pred_check_branch
      %1927 = sbr.rel (%p1925) target = $region64
    $region63: #{inverted_residual.1} parent=5 // pred_region
      %s1928 = ssub.s32 %s15, 2
      // Predicated region
      $region65: #{inverted_residual.1} parent=63 // pred_check
        %p1929 = pneg %p284
      $region66: #{inverted_residual.1} parent=63 // pred_check_branch
        %1931 = sbr.rel (%p1929) target = $region68
      $region67: #{inverted_residual.1} parent=63 // pred_region
        %s1932 = smul.u32 8, %s27
        %p1933 = scmp.lt.s32.totalorder %s26, 1
        %s1934 = scalar_select %p1933, %s26, 1
        %p1935 = scmp.lt.s32.totalorder %s1932, 15
        %s1936 = scalar_select %p1935, %s1932, 15
        %s1937 = smul.addr %s1936, 2
        %s1938 = smul.addr %s1934, 32
        %s1939 = sadd.s32 %s1937, %s1938
        %s1940 = smul.addr %s1939, 4
        %s1941 = scalar_lea.vmem %s9, %s1940
      $region68: #{inverted_residual.1} parent=63 // pred_fallthru
        _
    $region64: #{inverted_residual.1} parent=5 // pred_fallthru
      _
  $region6: #{inverted_residual.1} parent=0 // loop_footer
    %s19 = sadd.s32 1, %s15
  $region7: #{inverted_residual.1} parent=0 // loop_footer_branch
    %14 = sbr.rel target = $region3
  $region8: #{inverted_residual.1} parent=0 // loop_exit
    _

</llo_original>
